<compile_context>
chip_gen: v7x
topology: tpu7x:2x2x1
jax: 0.10.0
libtpu: 0.0.40
codegen_flags: <defaults>
</compile_context>

<pallas_src>
import functools

import jax
import jax.numpy as jnp
from jax.experimental import pallas as pl
from jax.experimental.pallas import tpu as pltpu


def _attention_kernel(x_ref, gamma_ref, beta_ref, wq_ref, wk_ref, wv_ref,
                      wo_ref, bo_ref, out_ref, attn_ref, xn_ref,
                      *, eps, group, dim_head):
    ng = pl.program_id(1)
    n = x_ref.shape[1]
    dim = x_ref.shape[2]

    # ---- once per batch element: LayerNorm (f32) -> cached bf16 slab, and
    #      initialize the resident output block with the broadcast bias.
    @pl.when(ng == 0)
    def _():
        x = x_ref[0]                                          # (N, dim) f32
        mu = jnp.mean(x, axis=-1, keepdims=True)
        var = jnp.mean((x - mu) * (x - mu), axis=-1, keepdims=True)
        xn = (x - mu) * jax.lax.rsqrt(var + eps)
        xn = xn * gamma_ref[...] + beta_ref[...]              # (N, dim) f32
        xn_ref[...] = xn.astype(xn_ref.dtype)                 # bf16 MXU feed
        out_ref[0] = jnp.broadcast_to(bo_ref[...], (n, dim)).astype(out_ref.dtype)

    xn = xn_ref[...]                                          # (N, dim) bf16

    # ---- fused, lane-dense per-group projections (scale folded into wq).
    q2 = jnp.dot(xn, wq_ref[0], preferred_element_type=jnp.float32)  # (N, G*dh)
    k2 = jnp.dot(xn, wk_ref[0], preferred_element_type=jnp.float32)
    v2 = jnp.dot(xn, wv_ref[0], preferred_element_type=jnp.float32)
    q2 = q2.astype(jnp.bfloat16)
    k2 = k2.astype(jnp.bfloat16)
    v2 = v2.astype(jnp.bfloat16)

    # ---- per-head scores / softmax / PV (static unroll over the G heads).
    ohs = []
    for g in range(group):
        sl = slice(g * dim_head, (g + 1) * dim_head)
        qh = q2[:, sl]                                        # (N, dh) bf16
        kh = k2[:, sl]
        vh = v2[:, sl]

        # scores: contract last dims directly (q @ k^T, no XLU transpose)
        dots = jax.lax.dot_general(
            qh, kh, dimension_numbers=(((1,), (1,)), ((), ())),
            preferred_element_type=jnp.float32)               # (N, N) f32

        # softmax in f32 (max-stabilized), EUP approx reciprocal
        m = jnp.max(dots, axis=-1, keepdims=True)
        e = jnp.exp(dots - m)
        attn = e * pl.reciprocal(jnp.sum(e, axis=-1, keepdims=True), approx=True)

        attn_ref[0, g] = attn.astype(attn_ref.dtype)          # bf16 writeback

        oh = jnp.dot(attn.astype(jnp.bfloat16), vh,
                     preferred_element_type=jnp.float32)      # (N, dh) f32
        ohs.append(oh.astype(jnp.bfloat16))

    # ---- K-dense out-projection for the whole group, accumulate into out_ref.
    oh_full = ohs[0] if group == 1 else jnp.concatenate(ohs, axis=-1)  # (N, G*dh)
    out_ref[0] += jnp.dot(oh_full, wo_ref[0],
                          preferred_element_type=jnp.float32)          # (N, dim)


def pallas_attention(x, w_qkv, w_out, b_out, gamma, beta, *, heads, dim_head,
                     attn_dtype=jnp.bfloat16, lane_target=128, eps=1e-5):
    """x: (B, N, dim). w_qkv: (dim, 3*inner). w_out: (inner, dim).
    b_out/gamma/beta: (1, dim).

    Returns (out (B, N, dim) f32, attn (B, heads, N, N) attn_dtype)."""
    B, N, dim = x.shape
    inner = heads * dim_head
    assert w_qkv.shape == (dim, 3 * inner) and w_out.shape == (inner, dim)
    scale = dim_head ** -0.5

    # Head grouping: G heads per grid step so each projection matmul is
    # G*dim_head lanes wide. 128 is v5e-safe; use lane_target=256 on v6e/v7x.
    group = max(1, min(heads, lane_target // max(1, dim_head)))
    while heads % group:
        group -= 1
    num_groups = heads // group
    gw = group * dim_head

    # Layout plumbing in the wrapper (outside the kernel): per-group weight
    # slabs in bf16; softmax scale folded into the q weights (one-time).
    w_q, w_k, w_v = jnp.split(w_qkv, 3, axis=-1)              # (dim, inner) each
    w_q = w_q * scale

    def group_weights(w):                                     # -> (NG, dim, G*dh)
        return (w.reshape(dim, num_groups, gw)
                 .transpose(1, 0, 2).astype(jnp.bfloat16))

    w_qg, w_kg, w_vg = map(group_weights, (w_q, w_k, w_v))
    w_og = w_out.reshape(num_groups, gw, dim).astype(jnp.bfloat16)  # (NG, G*dh, dim)

    kernel = functools.partial(_attention_kernel, eps=eps, group=group,
                               dim_head=dim_head)

    out_shapes = (
        jax.ShapeDtypeStruct((B, N, dim), jnp.float32),         # projected out
        jax.ShapeDtypeStruct((B, heads, N, N), attn_dtype),     # attention weights
    )

    # VMEM budget estimate (double-buffered blocks + scratch + f32 temporaries).
    attn_bytes = jnp.dtype(attn_dtype).itemsize
    block_bytes = (N * dim * 4                       # x block
                   + 3 * dim * gw * 2 + gw * dim * 2  # weight blocks
                   + 3 * dim * 4                      # gamma/beta/bias
                   + N * dim * 4                      # out block
                   + group * N * N * attn_bytes)      # attn block
    temp_bytes = 4 * N * N * 4 + 6 * N * gw * 4 + N * dim * 2
    vmem_limit = int(min(96 * 2**20, max(32 * 2**20, 2 * block_bytes + temp_bytes)))

    grid_spec = pltpu.PrefetchScalarGridSpec(
        num_scalar_prefetch=0,
        grid=(B, num_groups),
        in_specs=[
            pl.BlockSpec((1, N, dim), lambda b, g: (b, 0, 0)),      # x
            pl.BlockSpec((1, dim), lambda b, g: (0, 0)),            # gamma
            pl.BlockSpec((1, dim), lambda b, g: (0, 0)),            # beta
            pl.BlockSpec((1, dim, gw), lambda b, g: (g, 0, 0)),     # w_q[group g]
            pl.BlockSpec((1, dim, gw), lambda b, g: (g, 0, 0)),     # w_k[group g]
            pl.BlockSpec((1, dim, gw), lambda b, g: (g, 0, 0)),     # w_v[group g]
            pl.BlockSpec((1, gw, dim), lambda b, g: (g, 0, 0)),     # w_out[group g]
            pl.BlockSpec((1, dim), lambda b, g: (0, 0)),            # b_out
        ],
        out_specs=[
            pl.BlockSpec((1, N, dim), lambda b, g: (b, 0, 0)),      # out (acc over g)
            pl.BlockSpec((1, group, N, N), lambda b, g: (b, g, 0, 0)),  # attn
        ],
        scratch_shapes=[
            pltpu.VMEM((N, dim), jnp.bfloat16),   # cached LayerNorm(x), MXU feed
        ],
    )

    return pl.pallas_call(
        kernel,
        out_shape=out_shapes,
        grid_spec=grid_spec,
        compiler_params=pltpu.CompilerParams(
            dimension_semantics=("parallel", "arbitrary"),
            vmem_limit_bytes=vmem_limit),
    )(x, gamma, beta, w_qg, w_kg, w_vg, w_og, b_out)


def reference_attention(x, w_qkv, w_out, b_out, gamma, beta, *, heads, dim_head):
    """Pure-JAX f32 reference matching the PyTorch forward."""
    B, N, dim = x.shape
    inner = heads * dim_head
    scale = dim_head ** -0.5
    mu = jnp.mean(x, axis=-1, keepdims=True)
    var = jnp.mean((x - mu) ** 2, axis=-1, keepdims=True)
    xn = (x - mu) / jnp.sqrt(var + 1e-5) * gamma[0] + beta[0]
    qkv = xn @ w_qkv
    q, k, v = jnp.split(qkv, 3, axis=-1)

    def split_heads(t):
        return t.reshape(B, N, heads, dim_head).transpose(0, 2, 1, 3)

    q, k, v = map(split_heads, (q, k, v))
    dots = jnp.einsum('bhnd,bhmd->bhnm', q, k) * scale
    attn = jax.nn.softmax(dots, axis=-1)
    out = jnp.einsum('bhnm,bhmd->bhnd', attn, v)
    out = out.transpose(0, 2, 1, 3).reshape(B, N, inner)
    return out @ w_out + b_out[0], attn


if __name__ == "__main__":
    # Small shapes consistent with the module.
    B, N, dim = 2, 8, 32
    heads, dim_head = 4, 8
    inner = heads * dim_head

    key = jax.random.PRNGKey(0)
    kx, kqkv, kwo, kbo, kg, kb = jax.random.split(key, 6)

    x = jax.random.normal(kx, (B, N, dim), dtype=jnp.float32)

    # Deterministic synthetic parameters (module __init__ shapes).
    w_qkv = jax.random.normal(kqkv, (dim, 3 * inner), dtype=jnp.float32) * 0.05
    w_out = jax.random.normal(kwo, (inner, dim), dtype=jnp.float32) * 0.05
    b_out = jax.random.normal(kbo, (1, dim), dtype=jnp.float32) * 0.01
    gamma = 1.0 + 0.1 * jax.random.normal(kg, (1, dim), dtype=jnp.float32)
    beta = 0.05 * jax.random.normal(kb, (1, dim), dtype=jnp.float32)

    out, attn = pallas_attention(x, w_qkv, w_out, b_out, gamma, beta,
                                 heads=heads, dim_head=dim_head)
    out = jax.block_until_ready(out)
    attn = jax.block_until_ready(attn)

    ref_out, ref_attn = reference_attention(x, w_qkv, w_out, b_out, gamma, beta,
                                            heads=heads, dim_head=dim_head)
    assert out.shape == (B, N, dim) and attn.shape == (B, heads, N, N)
    # Tolerance accounts for bf16 MXU feeds, bf16 attn output, approx reciprocal.
    assert jnp.allclose(out, ref_out, atol=3e-2, rtol=3e-2)
    assert jnp.allclose(attn.astype(jnp.float32), ref_attn, atol=3e-2, rtol=3e-2)

    print("KERNEL_OK")
</pallas_src>

<mosaic_0001>
module attributes {stable_mosaic.version = 11 : i64} {
  func.func @_attention_kernel(%arg0: i32, %arg1: i32, %arg2: memref<1x8x32xf32, #tpu.memory_space<vmem>>, %arg3: memref<1x32xf32, #tpu.memory_space<vmem>>, %arg4: memref<1x32xf32, #tpu.memory_space<vmem>>, %arg5: memref<1x32x32xbf16, #tpu.memory_space<vmem>>, %arg6: memref<1x32x32xbf16, #tpu.memory_space<vmem>>, %arg7: memref<1x32x32xbf16, #tpu.memory_space<vmem>>, %arg8: memref<1x32x32xbf16, #tpu.memory_space<vmem>>, %arg9: memref<1x32xf32, #tpu.memory_space<vmem>>, %arg10: memref<1x8x32xf32, #tpu.memory_space<vmem>>, %arg11: memref<1x4x8x8xbf16, #tpu.memory_space<vmem>>, %arg12: memref<8x32xbf16, #tpu.memory_space<vmem>>) attributes {dimension_semantics = [#tpu.dimension_semantics<parallel>, #tpu.dimension_semantics<arbitrary>], iteration_bounds = array<i64: 2, 1>, scalar_prefetch = 0 : i64, scratch_operands = 1 : i64, tpu.core_type = #tpu.core_type<tc>, window_params = [{transform_indices = @transform_0, window_bounds = array<i64: 1, 8, 32>}, {pipeline_mode = #tpu.pipeline_mode<synchronous>, transform_indices = @transform_1, window_bounds = array<i64: 1, 32>}, {pipeline_mode = #tpu.pipeline_mode<synchronous>, transform_indices = @transform_2, window_bounds = array<i64: 1, 32>}, {transform_indices = @transform_3, window_bounds = array<i64: 1, 32, 32>}, {transform_indices = @transform_4, window_bounds = array<i64: 1, 32, 32>}, {transform_indices = @transform_5, window_bounds = array<i64: 1, 32, 32>}, {transform_indices = @transform_6, window_bounds = array<i64: 1, 32, 32>}, {pipeline_mode = #tpu.pipeline_mode<synchronous>, transform_indices = @transform_7, window_bounds = array<i64: 1, 32>}, {transform_indices = @transform_8, window_bounds = array<i64: 1, 8, 32>}, {transform_indices = @transform_9, window_bounds = array<i64: 1, 4, 8, 8>}]} {
    %c0_i32 = arith.constant 0 : i32
    %0 = arith.cmpi eq, %arg1, %c0_i32 : i32
    %1 = arith.extui %0 : i1 to i32
    %c0_i32_0 = arith.constant 0 : i32
    %2 = arith.cmpi ne, %1, %c0_i32_0 : i32
    scf.if %2 {
      %c0_52 = arith.constant 0 : index
      %c0_53 = arith.constant 0 : index
      %c0_54 = arith.constant 0 : index
      %110 = vector.load %arg2[%c0_52, %c0_53, %c0_54] : memref<1x8x32xf32, #tpu.memory_space<vmem>>, vector<1x8x32xf32>
      %111 = vector.shape_cast %110 : vector<1x8x32xf32> to vector<8x32xf32>
      %cst_55 = arith.constant dense<0.000000e+00> : vector<8xf32>
      %112 = vector.multi_reduction <add>, %111, %cst_55 [1] : vector<8x32xf32> to vector<8xf32>
      %113 = vector.shape_cast %112 : vector<8xf32> to vector<8x1xf32>
      %cst_56 = arith.constant 3.200000e+01 : f32
      %114 = vector.broadcast %cst_56 : f32 to vector<8x1xf32>
      %115 = arith.divf %113, %114 : vector<8x1xf32>
      %116 = vector.broadcast %115 : vector<8x1xf32> to vector<8x32xf32>
      %117 = arith.subf %111, %116 : vector<8x32xf32>
      %118 = vector.broadcast %115 : vector<8x1xf32> to vector<8x32xf32>
      %119 = arith.subf %111, %118 : vector<8x32xf32>
      %120 = arith.mulf %117, %119 : vector<8x32xf32>
      %cst_57 = arith.constant dense<0.000000e+00> : vector<8xf32>
      %121 = vector.multi_reduction <add>, %120, %cst_57 [1] : vector<8x32xf32> to vector<8xf32>
      %122 = vector.shape_cast %121 : vector<8xf32> to vector<8x1xf32>
      %cst_58 = arith.constant 3.200000e+01 : f32
      %123 = vector.broadcast %cst_58 : f32 to vector<8x1xf32>
      %124 = arith.divf %122, %123 : vector<8x1xf32>
      %125 = vector.broadcast %115 : vector<8x1xf32> to vector<8x32xf32>
      %126 = arith.subf %111, %125 : vector<8x32xf32>
      %cst_59 = arith.constant 9.99999974E-6 : f32
      %127 = vector.broadcast %cst_59 : f32 to vector<8x1xf32>
      %128 = arith.addf %124, %127 : vector<8x1xf32>
      %129 = math.rsqrt %128 : vector<8x1xf32>
      %130 = vector.broadcast %129 : vector<8x1xf32> to vector<8x32xf32>
      %131 = arith.mulf %126, %130 : vector<8x32xf32>
      %c0_60 = arith.constant 0 : index
      %c0_61 = arith.constant 0 : index
      %132 = vector.load %arg3[%c0_60, %c0_61] : memref<1x32xf32, #tpu.memory_space<vmem>>, vector<1x32xf32>
      %133 = vector.broadcast %132 : vector<1x32xf32> to vector<8x32xf32>
      %134 = arith.mulf %131, %133 : vector<8x32xf32>
      %c0_62 = arith.constant 0 : index
      %c0_63 = arith.constant 0 : index
      %135 = vector.load %arg4[%c0_62, %c0_63] : memref<1x32xf32, #tpu.memory_space<vmem>>, vector<1x32xf32>
      %136 = vector.broadcast %135 : vector<1x32xf32> to vector<8x32xf32>
      %137 = arith.addf %134, %136 : vector<8x32xf32>
      %138 = arith.truncf %137 : vector<8x32xf32> to vector<8x32xbf16>
      %c0_64 = arith.constant 0 : index
      %c0_65 = arith.constant 0 : index
      %139 = vector.load %arg12[%c0_64, %c0_65] : memref<8x32xbf16, #tpu.memory_space<vmem>>, vector<8x32xbf16>
      tpu.vector_store %arg12[%c0_64, %c0_65], %138 {strides = array<i32>} : memref<8x32xbf16, #tpu.memory_space<vmem>>, vector<8x32xbf16>,
      %c0_66 = arith.constant 0 : index
      %c0_67 = arith.constant 0 : index
      %140 = vector.load %arg9[%c0_66, %c0_67] : memref<1x32xf32, #tpu.memory_space<vmem>>, vector<1x32xf32>
      %141 = vector.shape_cast %140 : vector<1x32xf32> to vector<1x32xf32>
      %142 = vector.broadcast %141 : vector<1x32xf32> to vector<8x32xf32>
      %c0_68 = arith.constant 0 : index
      %c0_69 = arith.constant 0 : index
      %c0_70 = arith.constant 0 : index
      %143 = vector.load %arg10[%c0_68, %c0_69, %c0_70] : memref<1x8x32xf32, #tpu.memory_space<vmem>>, vector<1x8x32xf32>
      %144 = vector.shape_cast %143 : vector<1x8x32xf32> to vector<8x32xf32>
      %145 = vector.shape_cast %142 : vector<8x32xf32> to vector<1x8x32xf32>
      tpu.vector_store %arg10[%c0_68, %c0_69, %c0_70], %145 {strides = array<i32>} : memref<1x8x32xf32, #tpu.memory_space<vmem>>, vector<1x8x32xf32>,
    } else {
    }
    %c0 = arith.constant 0 : index
    %c0_1 = arith.constant 0 : index
    %3 = vector.load %arg12[%c0, %c0_1] : memref<8x32xbf16, #tpu.memory_space<vmem>>, vector<8x32xbf16>
    %c0_2 = arith.constant 0 : index
    %c0_3 = arith.constant 0 : index
    %c0_4 = arith.constant 0 : index
    %4 = vector.load %arg5[%c0_2, %c0_3, %c0_4] : memref<1x32x32xbf16, #tpu.memory_space<vmem>>, vector<1x32x32xbf16>
    %5 = vector.shape_cast %4 : vector<1x32x32xbf16> to vector<32x32xbf16>
    %cst = arith.constant dense<0.000000e+00> : vector<8x32xf32>
    %6 = tpu.matmul %3, %5, %cst {dimension_numbers = #tpu.dot_dimension_numbers<[1], [0], [0], [1], [0, 0, 1, 1], [], []>} : vector<8x32xbf16>, vector<32x32xbf16>, vector<8x32xf32> -> vector<8x32xf32>
    %c0_5 = arith.constant 0 : index
    %c0_6 = arith.constant 0 : index
    %c0_7 = arith.constant 0 : index
    %7 = vector.load %arg6[%c0_5, %c0_6, %c0_7] : memref<1x32x32xbf16, #tpu.memory_space<vmem>>, vector<1x32x32xbf16>
    %8 = vector.shape_cast %7 : vector<1x32x32xbf16> to vector<32x32xbf16>
    %cst_8 = arith.constant dense<0.000000e+00> : vector<8x32xf32>
    %9 = tpu.matmul %3, %8, %cst_8 {dimension_numbers = #tpu.dot_dimension_numbers<[1], [0], [0], [1], [0, 0, 1, 1], [], []>} : vector<8x32xbf16>, vector<32x32xbf16>, vector<8x32xf32> -> vector<8x32xf32>
    %c0_9 = arith.constant 0 : index
    %c0_10 = arith.constant 0 : index
    %c0_11 = arith.constant 0 : index
    %10 = vector.load %arg7[%c0_9, %c0_10, %c0_11] : memref<1x32x32xbf16, #tpu.memory_space<vmem>>, vector<1x32x32xbf16>
    %11 = vector.shape_cast %10 : vector<1x32x32xbf16> to vector<32x32xbf16>
    %cst_12 = arith.constant dense<0.000000e+00> : vector<8x32xf32>
    %12 = tpu.matmul %3, %11, %cst_12 {dimension_numbers = #tpu.dot_dimension_numbers<[1], [0], [0], [1], [0, 0, 1, 1], [], []>} : vector<8x32xbf16>, vector<32x32xbf16>, vector<8x32xf32> -> vector<8x32xf32>
    %13 = arith.truncf %6 : vector<8x32xf32> to vector<8x32xbf16>
    %14 = arith.truncf %9 : vector<8x32xf32> to vector<8x32xbf16>
    %15 = arith.truncf %12 : vector<8x32xf32> to vector<8x32xbf16>
    %16 = vector.extract_strided_slice %13 {offsets = [0, 0], sizes = [8, 8], strides = [1, 1]} : vector<8x32xbf16> to vector<8x8xbf16>
    %17 = vector.extract_strided_slice %14 {offsets = [0, 0], sizes = [8, 8], strides = [1, 1]} : vector<8x32xbf16> to vector<8x8xbf16>
    %18 = vector.extract_strided_slice %15 {offsets = [0, 0], sizes = [8, 8], strides = [1, 1]} : vector<8x32xbf16> to vector<8x8xbf16>
    %cst_13 = arith.constant dense<0.000000e+00> : vector<8x8xf32>
    %19 = tpu.matmul %16, %17, %cst_13 {dimension_numbers = #tpu.dot_dimension_numbers<[1], [1], [0], [0], [0, 0, 1, 0], [], []>} : vector<8x8xbf16>, vector<8x8xbf16>, vector<8x8xf32> -> vector<8x8xf32>
    %cst_14 = arith.constant dense<0xFF800000> : vector<8xf32>
    %20 = vector.multi_reduction <maximumf>, %19, %cst_14 [1] : vector<8x8xf32> to vector<8xf32>
    %21 = vector.shape_cast %20 : vector<8xf32> to vector<8x1xf32>
    %22 = vector.broadcast %21 : vector<8x1xf32> to vector<8x8xf32>
    %23 = arith.subf %19, %22 : vector<8x8xf32>
    %24 = math.exp %23 : vector<8x8xf32>
    %cst_15 = arith.constant dense<0.000000e+00> : vector<8xf32>
    %25 = vector.multi_reduction <add>, %24, %cst_15 [1] : vector<8x8xf32> to vector<8xf32>
    %26 = vector.shape_cast %25 : vector<8xf32> to vector<8x1xf32>
    %27 = tpu.reciprocal %26 {approx = true} : vector<8x1xf32> -> vector<8x1xf32>
    %28 = vector.broadcast %27 : vector<8x1xf32> to vector<8x8xf32>
    %29 = arith.mulf %24, %28 : vector<8x8xf32>
    %30 = arith.truncf %29 : vector<8x8xf32> to vector<8x8xbf16>
    %c0_16 = arith.constant 0 : index
    %c0_17 = arith.constant 0 : index
    %c0_18 = arith.constant 0 : index
    %c0_19 = arith.constant 0 : index
    %31 = vector.load %arg11[%c0_16, %c0_17, %c0_18, %c0_19] : memref<1x4x8x8xbf16, #tpu.memory_space<vmem>>, vector<1x1x8x8xbf16>
    %32 = vector.shape_cast %31 : vector<1x1x8x8xbf16> to vector<8x8xbf16>
    %33 = vector.shape_cast %30 : vector<8x8xbf16> to vector<1x1x8x8xbf16>
    tpu.vector_store %arg11[%c0_16, %c0_17, %c0_18, %c0_19], %33 {strides = array<i32>} : memref<1x4x8x8xbf16, #tpu.memory_space<vmem>>, vector<1x1x8x8xbf16>,
    %34 = arith.truncf %29 : vector<8x8xf32> to vector<8x8xbf16>
    %cst_20 = arith.constant dense<0.000000e+00> : vector<8x8xf32>
    %35 = tpu.matmul %34, %18, %cst_20 {dimension_numbers = #tpu.dot_dimension_numbers<[1], [0], [0], [1], [0, 0, 1, 1], [], []>} : vector<8x8xbf16>, vector<8x8xbf16>, vector<8x8xf32> -> vector<8x8xf32>
    %36 = arith.truncf %35 : vector<8x8xf32> to vector<8x8xbf16>
    %37 = vector.extract_strided_slice %13 {offsets = [0, 8], sizes = [8, 8], strides = [1, 1]} : vector<8x32xbf16> to vector<8x8xbf16>
    %38 = vector.extract_strided_slice %14 {offsets = [0, 8], sizes = [8, 8], strides = [1, 1]} : vector<8x32xbf16> to vector<8x8xbf16>
    %39 = vector.extract_strided_slice %15 {offsets = [0, 8], sizes = [8, 8], strides = [1, 1]} : vector<8x32xbf16> to vector<8x8xbf16>
    %cst_21 = arith.constant dense<0.000000e+00> : vector<8x8xf32>
    %40 = tpu.matmul %37, %38, %cst_21 {dimension_numbers = #tpu.dot_dimension_numbers<[1], [1], [0], [0], [0, 0, 1, 0], [], []>} : vector<8x8xbf16>, vector<8x8xbf16>, vector<8x8xf32> -> vector<8x8xf32>
    %cst_22 = arith.constant dense<0xFF800000> : vector<8xf32>
    %41 = vector.multi_reduction <maximumf>, %40, %cst_22 [1] : vector<8x8xf32> to vector<8xf32>
    %42 = vector.shape_cast %41 : vector<8xf32> to vector<8x1xf32>
    %43 = vector.broadcast %42 : vector<8x1xf32> to vector<8x8xf32>
    %44 = arith.subf %40, %43 : vector<8x8xf32>
    %45 = math.exp %44 : vector<8x8xf32>
    %cst_23 = arith.constant dense<0.000000e+00> : vector<8xf32>
    %46 = vector.multi_reduction <add>, %45, %cst_23 [1] : vector<8x8xf32> to vector<8xf32>
    %47 = vector.shape_cast %46 : vector<8xf32> to vector<8x1xf32>
    %48 = tpu.reciprocal %47 {approx = true} : vector<8x1xf32> -> vector<8x1xf32>
    %49 = vector.broadcast %48 : vector<8x1xf32> to vector<8x8xf32>
    %50 = arith.mulf %45, %49 : vector<8x8xf32>
    %51 = arith.truncf %50 : vector<8x8xf32> to vector<8x8xbf16>
    %c0_24 = arith.constant 0 : index
    %c1 = arith.constant 1 : index
    %c0_25 = arith.constant 0 : index
    %c0_26 = arith.constant 0 : index
    %52 = vector.load %arg11[%c0_24, %c1, %c0_25, %c0_26] : memref<1x4x8x8xbf16, #tpu.memory_space<vmem>>, vector<1x1x8x8xbf16>
    %53 = vector.shape_cast %52 : vector<1x1x8x8xbf16> to vector<8x8xbf16>
    %54 = vector.shape_cast %51 : vector<8x8xbf16> to vector<1x1x8x8xbf16>
    tpu.vector_store %arg11[%c0_24, %c1, %c0_25, %c0_26], %54 {strides = array<i32>} : memref<1x4x8x8xbf16, #tpu.memory_space<vmem>>, vector<1x1x8x8xbf16>,
    %55 = arith.truncf %50 : vector<8x8xf32> to vector<8x8xbf16>
    %cst_27 = arith.constant dense<0.000000e+00> : vector<8x8xf32>
    %56 = tpu.matmul %55, %39, %cst_27 {dimension_numbers = #tpu.dot_dimension_numbers<[1], [0], [0], [1], [0, 0, 1, 1], [], []>} : vector<8x8xbf16>, vector<8x8xbf16>, vector<8x8xf32> -> vector<8x8xf32>
    %57 = arith.truncf %56 : vector<8x8xf32> to vector<8x8xbf16>
    %58 = vector.extract_strided_slice %13 {offsets = [0, 16], sizes = [8, 8], strides = [1, 1]} : vector<8x32xbf16> to vector<8x8xbf16>
    %59 = vector.extract_strided_slice %14 {offsets = [0, 16], sizes = [8, 8], strides = [1, 1]} : vector<8x32xbf16> to vector<8x8xbf16>
    %60 = vector.extract_strided_slice %15 {offsets = [0, 16], sizes = [8, 8], strides = [1, 1]} : vector<8x32xbf16> to vector<8x8xbf16>
    %cst_28 = arith.constant dense<0.000000e+00> : vector<8x8xf32>
    %61 = tpu.matmul %58, %59, %cst_28 {dimension_numbers = #tpu.dot_dimension_numbers<[1], [1], [0], [0], [0, 0, 1, 0], [], []>} : vector<8x8xbf16>, vector<8x8xbf16>, vector<8x8xf32> -> vector<8x8xf32>
    %cst_29 = arith.constant dense<0xFF800000> : vector<8xf32>
    %62 = vector.multi_reduction <maximumf>, %61, %cst_29 [1] : vector<8x8xf32> to vector<8xf32>
    %63 = vector.shape_cast %62 : vector<8xf32> to vector<8x1xf32>
    %64 = vector.broadcast %63 : vector<8x1xf32> to vector<8x8xf32>
    %65 = arith.subf %61, %64 : vector<8x8xf32>
    %66 = math.exp %65 : vector<8x8xf32>
    %cst_30 = arith.constant dense<0.000000e+00> : vector<8xf32>
    %67 = vector.multi_reduction <add>, %66, %cst_30 [1] : vector<8x8xf32> to vector<8xf32>
    %68 = vector.shape_cast %67 : vector<8xf32> to vector<8x1xf32>
    %69 = tpu.reciprocal %68 {approx = true} : vector<8x1xf32> -> vector<8x1xf32>
    %70 = vector.broadcast %69 : vector<8x1xf32> to vector<8x8xf32>
    %71 = arith.mulf %66, %70 : vector<8x8xf32>
    %72 = arith.truncf %71 : vector<8x8xf32> to vector<8x8xbf16>
    %c0_31 = arith.constant 0 : index
    %c2 = arith.constant 2 : index
    %c0_32 = arith.constant 0 : index
    %c0_33 = arith.constant 0 : index
    %73 = vector.load %arg11[%c0_31, %c2, %c0_32, %c0_33] : memref<1x4x8x8xbf16, #tpu.memory_space<vmem>>, vector<1x1x8x8xbf16>
    %74 = vector.shape_cast %73 : vector<1x1x8x8xbf16> to vector<8x8xbf16>
    %75 = vector.shape_cast %72 : vector<8x8xbf16> to vector<1x1x8x8xbf16>
    tpu.vector_store %arg11[%c0_31, %c2, %c0_32, %c0_33], %75 {strides = array<i32>} : memref<1x4x8x8xbf16, #tpu.memory_space<vmem>>, vector<1x1x8x8xbf16>,
    %76 = arith.truncf %71 : vector<8x8xf32> to vector<8x8xbf16>
    %cst_34 = arith.constant dense<0.000000e+00> : vector<8x8xf32>
    %77 = tpu.matmul %76, %60, %cst_34 {dimension_numbers = #tpu.dot_dimension_numbers<[1], [0], [0], [1], [0, 0, 1, 1], [], []>} : vector<8x8xbf16>, vector<8x8xbf16>, vector<8x8xf32> -> vector<8x8xf32>
    %78 = arith.truncf %77 : vector<8x8xf32> to vector<8x8xbf16>
    %79 = vector.extract_strided_slice %13 {offsets = [0, 24], sizes = [8, 8], strides = [1, 1]} : vector<8x32xbf16> to vector<8x8xbf16>
    %80 = vector.extract_strided_slice %14 {offsets = [0, 24], sizes = [8, 8], strides = [1, 1]} : vector<8x32xbf16> to vector<8x8xbf16>
    %81 = vector.extract_strided_slice %15 {offsets = [0, 24], sizes = [8, 8], strides = [1, 1]} : vector<8x32xbf16> to vector<8x8xbf16>
    %cst_35 = arith.constant dense<0.000000e+00> : vector<8x8xf32>
    %82 = tpu.matmul %79, %80, %cst_35 {dimension_numbers = #tpu.dot_dimension_numbers<[1], [1], [0], [0], [0, 0, 1, 0], [], []>} : vector<8x8xbf16>, vector<8x8xbf16>, vector<8x8xf32> -> vector<8x8xf32>
    %cst_36 = arith.constant dense<0xFF800000> : vector<8xf32>
    %83 = vector.multi_reduction <maximumf>, %82, %cst_36 [1] : vector<8x8xf32> to vector<8xf32>
    %84 = vector.shape_cast %83 : vector<8xf32> to vector<8x1xf32>
    %85 = vector.broadcast %84 : vector<8x1xf32> to vector<8x8xf32>
    %86 = arith.subf %82, %85 : vector<8x8xf32>
    %87 = math.exp %86 : vector<8x8xf32>
    %cst_37 = arith.constant dense<0.000000e+00> : vector<8xf32>
    %88 = vector.multi_reduction <add>, %87, %cst_37 [1] : vector<8x8xf32> to vector<8xf32>
    %89 = vector.shape_cast %88 : vector<8xf32> to vector<8x1xf32>
    %90 = tpu.reciprocal %89 {approx = true} : vector<8x1xf32> -> vector<8x1xf32>
    %91 = vector.broadcast %90 : vector<8x1xf32> to vector<8x8xf32>
    %92 = arith.mulf %87, %91 : vector<8x8xf32>
    %93 = arith.truncf %92 : vector<8x8xf32> to vector<8x8xbf16>
    %c0_38 = arith.constant 0 : index
    %c3 = arith.constant 3 : index
    %c0_39 = arith.constant 0 : index
    %c0_40 = arith.constant 0 : index
    %94 = vector.load %arg11[%c0_38, %c3, %c0_39, %c0_40] : memref<1x4x8x8xbf16, #tpu.memory_space<vmem>>, vector<1x1x8x8xbf16>
    %95 = vector.shape_cast %94 : vector<1x1x8x8xbf16> to vector<8x8xbf16>
    %96 = vector.shape_cast %93 : vector<8x8xbf16> to vector<1x1x8x8xbf16>
    tpu.vector_store %arg11[%c0_38, %c3, %c0_39, %c0_40], %96 {strides = array<i32>} : memref<1x4x8x8xbf16, #tpu.memory_space<vmem>>, vector<1x1x8x8xbf16>,
    %97 = arith.truncf %92 : vector<8x8xf32> to vector<8x8xbf16>
    %cst_41 = arith.constant dense<0.000000e+00> : vector<8x8xf32>
    %98 = tpu.matmul %97, %81, %cst_41 {dimension_numbers = #tpu.dot_dimension_numbers<[1], [0], [0], [1], [0, 0, 1, 1], [], []>} : vector<8x8xbf16>, vector<8x8xbf16>, vector<8x8xf32> -> vector<8x8xf32>
    %99 = arith.truncf %98 : vector<8x8xf32> to vector<8x8xbf16>
    %100 = tpu.concatenate %36, %57, %78, %99 in 1 : vector<8x8xbf16>, vector<8x8xbf16>, vector<8x8xbf16>, vector<8x8xbf16> -> vector<8x32xbf16>
    %c0_42 = arith.constant 0 : index
    %c0_43 = arith.constant 0 : index
    %c0_44 = arith.constant 0 : index
    %101 = vector.load %arg10[%c0_42, %c0_43, %c0_44] : memref<1x8x32xf32, #tpu.memory_space<vmem>>, vector<1x8x32xf32>
    %102 = vector.shape_cast %101 : vector<1x8x32xf32> to vector<8x32xf32>
    %c0_45 = arith.constant 0 : index
    %c0_46 = arith.constant 0 : index
    %c0_47 = arith.constant 0 : index
    %103 = vector.load %arg8[%c0_45, %c0_46, %c0_47] : memref<1x32x32xbf16, #tpu.memory_space<vmem>>, vector<1x32x32xbf16>
    %104 = vector.shape_cast %103 : vector<1x32x32xbf16> to vector<32x32xbf16>
    %cst_48 = arith.constant dense<0.000000e+00> : vector<8x32xf32>
    %105 = tpu.matmul %100, %104, %cst_48 {dimension_numbers = #tpu.dot_dimension_numbers<[1], [0], [0], [1], [0, 0, 1, 1], [], []>} : vector<8x32xbf16>, vector<32x32xbf16>, vector<8x32xf32> -> vector<8x32xf32>
    %106 = arith.addf %102, %105 : vector<8x32xf32>
    %c0_49 = arith.constant 0 : index
    %c0_50 = arith.constant 0 : index
    %c0_51 = arith.constant 0 : index
    %107 = vector.load %arg10[%c0_49, %c0_50, %c0_51] : memref<1x8x32xf32, #tpu.memory_space<vmem>>, vector<1x8x32xf32>
    %108 = vector.shape_cast %107 : vector<1x8x32xf32> to vector<8x32xf32>
    %109 = vector.shape_cast %106 : vector<8x32xf32> to vector<1x8x32xf32>
    tpu.vector_store %arg10[%c0_49, %c0_50, %c0_51], %109 {strides = array<i32>} : memref<1x8x32xf32, #tpu.memory_space<vmem>>, vector<1x8x32xf32>,
    return
  }
  func.func @transform_0(%arg0: i32, %arg1: i32) -> (i32, i32, i32) {
    %c0_i32 = arith.constant 0 : i32
    %c0_i32_0 = arith.constant 0 : i32
    %c0_i32_1 = arith.constant 0 : i32
    return %arg0, %c0_i32, %c0_i32_0 : i32, i32, i32
  }
  func.func @transform_1(%arg0: i32, %arg1: i32) -> (i32, i32) {
    %c0_i32 = arith.constant 0 : i32
    %c0_i32_0 = arith.constant 0 : i32
    %c0_i32_1 = arith.constant 0 : i32
    return %c0_i32, %c0_i32_0 : i32, i32
  }
  func.func @transform_2(%arg0: i32, %arg1: i32) -> (i32, i32) {
    %c0_i32 = arith.constant 0 : i32
    %c0_i32_0 = arith.constant 0 : i32
    %c0_i32_1 = arith.constant 0 : i32
    return %c0_i32, %c0_i32_0 : i32, i32
  }
  func.func @transform_3(%arg0: i32, %arg1: i32) -> (i32, i32, i32) {
    %c0_i32 = arith.constant 0 : i32
    %c0_i32_0 = arith.constant 0 : i32
    %c0_i32_1 = arith.constant 0 : i32
    return %arg1, %c0_i32, %c0_i32_0 : i32, i32, i32
  }
  func.func @transform_4(%arg0: i32, %arg1: i32) -> (i32, i32, i32) {
    %c0_i32 = arith.constant 0 : i32
    %c0_i32_0 = arith.constant 0 : i32
    %c0_i32_1 = arith.constant 0 : i32
    return %arg1, %c0_i32, %c0_i32_0 : i32, i32, i32
  }
  func.func @transform_5(%arg0: i32, %arg1: i32) -> (i32, i32, i32) {
    %c0_i32 = arith.constant 0 : i32
    %c0_i32_0 = arith.constant 0 : i32
    %c0_i32_1 = arith.constant 0 : i32
    return %arg1, %c0_i32, %c0_i32_0 : i32, i32, i32
  }
  func.func @transform_6(%arg0: i32, %arg1: i32) -> (i32, i32, i32) {
    %c0_i32 = arith.constant 0 : i32
    %c0_i32_0 = arith.constant 0 : i32
    %c0_i32_1 = arith.constant 0 : i32
    return %arg1, %c0_i32, %c0_i32_0 : i32, i32, i32
  }
  func.func @transform_7(%arg0: i32, %arg1: i32) -> (i32, i32) {
    %c0_i32 = arith.constant 0 : i32
    %c0_i32_0 = arith.constant 0 : i32
    %c0_i32_1 = arith.constant 0 : i32
    return %c0_i32, %c0_i32_0 : i32, i32
  }
  func.func @transform_8(%arg0: i32, %arg1: i32) -> (i32, i32, i32) {
    %c0_i32 = arith.constant 0 : i32
    %c0_i32_0 = arith.constant 0 : i32
    %c0_i32_1 = arith.constant 0 : i32
    return %arg0, %c0_i32, %c0_i32_0 : i32, i32, i32
  }
  func.func @transform_9(%arg0: i32, %arg1: i32) -> (i32, i32, i32, i32) {
    %c0_i32 = arith.constant 0 : i32
    %c0_i32_0 = arith.constant 0 : i32
    %c0_i32_1 = arith.constant 0 : i32
    return %arg0, %arg1, %c0_i32, %c0_i32_0 : i32, i32, i32, i32
  }
}

</mosaic_0001>

<llo_original>
// kernel: tpu_custom_call.1
$region0: #{tpu_custom_call.1}
  #allocation0 [shape = 'u32[]', space=smem, size = 0x4, offset = 0x4, fixed_abs, tag = 'smem constant byte address 0x4 - core index']
  #allocation1 [shape = 'u32[144,128]{1,0:T(1,128)}', space=vmem, size = 0x12000, scoped, tag = 'internal scratch']
  #allocation2 [shape = 'bf16[8,32]{1,0:T(8,128)(2,1)}', space=vmem, size = 0x800, scoped, tag = 'scratch operand']
  %s0 = inlined_call_operand.hbm [shape: f32[2,8,32], index: 0, kind: input, shape index: {}]
  %s1 = inlined_call_operand.vmem [shape: f32[1,32], index: 1, kind: input, shape index: {}]
  %s2 = inlined_call_operand.vmem [shape: f32[1,32], index: 2, kind: input, shape index: {}]
  %s3 = inlined_call_operand.hbm [shape: bf16[1,32,32], index: 3, kind: input, shape index: {}]
  %s4 = inlined_call_operand.hbm [shape: bf16[1,32,32], index: 4, kind: input, shape index: {}]
  %s5 = inlined_call_operand.vmem [shape: bf16[1,32,32], index: 5, kind: input, shape index: {}]
  %s6 = inlined_call_operand.hbm [shape: bf16[1,32,32], index: 6, kind: input, shape index: {}]
  %s7 = inlined_call_operand.vmem [shape: f32[1,32], index: 7, kind: input, shape index: {}]
  %s8 = inlined_call_operand.hbm [shape: f32[2,8,32], index: 8, kind: output, shape index: {0}]
  %s9 = inlined_call_operand.hbm [shape: bf16[2,4,8,8], index: 9, kind: output, shape index: {1}]
  %10 = xla_tuple %s8, %s9
  %s11 = sld [smem:[#allocation0]]
  $region93: #{tpu_custom_call.1} parent=0
    _
  %s13 = ssub.s32 1, %s11
  %s14 = scalar_select 0, %s13, %s11
  $region1: #{tpu_custom_call.1} parent=0
    #allocation3 [shape = 'u8[8192]{0}', space=vmem, size = 0x2000, scoped, tag = 'input window, operand 0']
    #allocation4 [shape = 's32[2]{0}', space=sflag, size = 0x8, scoped, tag = 'scoped memory for tpu_custom_call.1']
    #allocation5 [shape = 's32[2]{0}', space=sflag, size = 0x8, scoped, tag = 'scoped memory for tpu_custom_call.1']
    #allocation6 [shape = 'u8[8192]{0}', space=vmem, size = 0x2000, scoped, tag = 'input window, operand 3, single buffered']
    #allocation7 [shape = 's32[1]{0}', space=sflag, size = 0x4, scoped, tag = 'scoped memory for tpu_custom_call.1']
    #allocation8 [shape = 'u8[8192]{0}', space=vmem, size = 0x2000, scoped, tag = 'input window, operand 4, single buffered']
    #allocation9 [shape = 'u8[8192]{0}', space=vmem, size = 0x2000, scoped, tag = 'input window, operand 6, single buffered']
    #allocation10 [shape = 's32[1]{0}', space=sflag, size = 0x4, scoped, tag = 'scoped memory for tpu_custom_call.1']
    #allocation11 [shape = 'u8[8192]{0}', space=vmem, size = 0x2000, scoped, tag = 'output window, operand 0']
    #allocation12 [shape = 'u8[16384]{0}', space=vmem, size = 0x4000, scoped, tag = 'output window, operand 1']
    #allocation13 [shape = 's32[2]{0}', space=sflag, size = 0x8, scoped, tag = 'scoped memory for tpu_custom_call.1']
    %15 = vsyncpa [#allocation4], 0
    %s16 = scalar_lea.sflag [#allocation4], 1
    %17 = vsyncpa %s16, 0
    %18 = vsyncpa [#allocation7], 0
    %19 = vsyncpa [#allocation10], 0
    %20 = vsyncpa [#allocation5], 0
    %s21 = scalar_lea.sflag [#allocation5], 1
    %22 = vsyncpa %s21, 0
    %23 = vsyncpa [#allocation13], 0
    %s24 = scalar_lea.sflag [#allocation13], 1
    %25 = vsyncpa %s24, 0
    loop: start=0, step=1, limit=4
    $region2: #{tpu_custom_call.1} parent=1 // loop_pre_header
      _
    $region3: #{tpu_custom_call.1} parent=1 // loop_header
      %s27 = sphi 0, %s31
      %p28 = scmp.ge.s32.totalorder %s27, 4
      %s34 = sphi 0, %s46
      %s35 = sphi 0, %s42
      %s36 = sphi 0, %s34
      %s37 = sphi 0, %s35
      %s38 = sphi 0, %s36
      %s39 = sphi 0, %s37
      %s49 = sphi 0, %s51
      %s52 = sphi 0, %s49
      %s53 = sphi 0, %s52
      %s69 = sphi 0, %s53
      %s73 = sphi 0, %s73
      %s75 = sphi 0, %s73
      %s76 = sphi 0, %s75
      %s90 = sphi 0, %s76
      %s94 = sphi 0, %s94
      %s96 = sphi 0, %s94
      %s97 = sphi 0, %s96
      %s111 = sphi 0, %s97
      %s117 = sphi 0, %s119
      %s120 = sphi 0, %s117
      %s121 = sphi 0, %s120
      %s137 = sphi 0, %s121
      %s143 = sphi 0, %s145
      %s146 = sphi 0, %s143
      %s147 = sphi 0, %s146
      %s163 = sphi 0, %s147
      %s169 = sphi 0, %s171
      %s172 = sphi 0, %s169
      %s173 = sphi 0, %s172
      %s189 = sphi 0, %s173
      %s195 = sphi 0, %s197
      %s198 = sphi 0, %s195
      %s199 = sphi 0, %s198
      %s215 = sphi 0, %s199
      %s219 = sphi 0, %s219
      %s221 = sphi 0, %s219
      %s222 = sphi 0, %s221
      %s236 = sphi 0, %s222
      %s242 = sphi 0, %s244
      %s245 = sphi 0, %s242
      %s246 = sphi 0, %s245
      %s262 = sphi 0, %s246
      %s270 = sphi 0, %s272
      %s273 = sphi 0, %s270
      %s274 = sphi 0, %s273
      %s290 = sphi 0, %s274
    $region4: #{tpu_custom_call.1} parent=1 // loop_header_branch
      %30 = sbr.rel (%p28) target = $region8
    $region5: #{tpu_custom_call.1} parent=1 // loop_body
      %s32 = ssub.s32 %s27, 1
      %s33 = ssub.s32 %s27, 2
      %s40 = sadd.s32 1, %s35
      %p41 = scmp.ge.s32.totalorder %s40, 1
      %s42 = scalar_select %p41, 0, %s40
      %s43 = sadd.s32 1, %s34
      %s44 = scalar_select %p41, %s43, %s34
      %p45 = scmp.ge.s32.totalorder %s44, 2
      %s46 = scalar_select %p45, 0, %s44
      %s47 = ssub.s32 %s34, %s46
      %p48 = scmp.eq.s32.totalorder %s47, 0
      %s50 = sadd.s32 %s49, 1
      %s51 = scalar_select %p48, %s49, %s50
      %p54 = pneg %p48
      %p55 = scmp.eq.s32.totalorder %s27, 1
      %p56 = por %p54, %p55
      %p57 = scmp.ne.s32.totalorder %s49, %s52
      %p58 = scmp.eq.s32.totalorder %s27, 0
      %p59 = por %p57, %p58
      %p60 = scmp.ne.s32.totalorder %s49, %s52
      %p61 = scmp.eq.s32.totalorder %s32, 1
      %p62 = por %p60, %p61
      %p63 = scmp.ne.s32.totalorder %s52, %s53
      %p64 = scmp.eq.s32.totalorder %s32, 0
      %p65 = por %p63, %p64
      %p66 = scmp.ne.s32.totalorder %s52, %s53
      %p67 = scmp.eq.s32.totalorder %s33, 1
      %p68 = por %p66, %p67
      %p70 = scmp.ne.s32.totalorder %s53, %s69
      %p71 = scmp.eq.s32.totalorder %s33, 0
      %p72 = por %p70, %p71
      %s74 = sadd.s32 %s73, 1
      %p77 = scmp.eq.s32.totalorder %s27, 1
      %p78 = scmp.ne.s32.totalorder %s73, %s75
      %p79 = scmp.eq.s32.totalorder %s27, 0
      %p80 = por %p78, %p79
      %p81 = scmp.ne.s32.totalorder %s73, %s75
      %p82 = scmp.eq.s32.totalorder %s32, 1
      %p83 = por %p81, %p82
      %p84 = scmp.ne.s32.totalorder %s75, %s76
      %p85 = scmp.eq.s32.totalorder %s32, 0
      %p86 = por %p84, %p85
      %p87 = scmp.ne.s32.totalorder %s75, %s76
      %p88 = scmp.eq.s32.totalorder %s33, 1
      %p89 = por %p87, %p88
      %p91 = scmp.ne.s32.totalorder %s76, %s90
      %p92 = scmp.eq.s32.totalorder %s33, 0
      %p93 = por %p91, %p92
      %s95 = sadd.s32 %s94, 1
      %p98 = scmp.eq.s32.totalorder %s27, 1
      %p99 = scmp.ne.s32.totalorder %s94, %s96
      %p100 = scmp.eq.s32.totalorder %s27, 0
      %p101 = por %p99, %p100
      %p102 = scmp.ne.s32.totalorder %s94, %s96
      %p103 = scmp.eq.s32.totalorder %s32, 1
      %p104 = por %p102, %p103
      %p105 = scmp.ne.s32.totalorder %s96, %s97
      %p106 = scmp.eq.s32.totalorder %s32, 0
      %p107 = por %p105, %p106
      %p108 = scmp.ne.s32.totalorder %s96, %s97
      %p109 = scmp.eq.s32.totalorder %s33, 1
      %p110 = por %p108, %p109
      %p112 = scmp.ne.s32.totalorder %s97, %s111
      %p113 = scmp.eq.s32.totalorder %s33, 0
      %p114 = por %p112, %p113
      %s115 = ssub.s32 %s35, %s42
      %p116 = scmp.eq.s32.totalorder %s115, 0
      %s118 = sadd.s32 %s117, 1
      %s119 = scalar_select %p116, %s117, %s118
      %p122 = pneg %p116
      %p123 = scmp.eq.s32.totalorder %s27, 1
      %p124 = por %p122, %p123
      %p125 = scmp.ne.s32.totalorder %s117, %s120
      %p126 = scmp.eq.s32.totalorder %s27, 0
      %p127 = por %p125, %p126
      %p128 = scmp.ne.s32.totalorder %s117, %s120
      %p129 = scmp.eq.s32.totalorder %s32, 1
      %p130 = por %p128, %p129
      %p131 = scmp.ne.s32.totalorder %s120, %s121
      %p132 = scmp.eq.s32.totalorder %s32, 0
      %p133 = por %p131, %p132
      %p134 = scmp.ne.s32.totalorder %s120, %s121
      %p135 = scmp.eq.s32.totalorder %s33, 1
      %p136 = por %p134, %p135
      %p138 = scmp.ne.s32.totalorder %s121, %s137
      %p139 = scmp.eq.s32.totalorder %s33, 0
      %p140 = por %p138, %p139
      %s141 = ssub.s32 %s35, %s42
      %p142 = scmp.eq.s32.totalorder %s141, 0
      %s144 = sadd.s32 %s143, 1
      %s145 = scalar_select %p142, %s143, %s144
      %p148 = pneg %p142
      %p149 = scmp.eq.s32.totalorder %s27, 1
      %p150 = por %p148, %p149
      %p151 = scmp.ne.s32.totalorder %s143, %s146
      %p152 = scmp.eq.s32.totalorder %s27, 0
      %p153 = por %p151, %p152
      %p154 = scmp.ne.s32.totalorder %s143, %s146
      %p155 = scmp.eq.s32.totalorder %s32, 1
      %p156 = por %p154, %p155
      %p157 = scmp.ne.s32.totalorder %s146, %s147
      %p158 = scmp.eq.s32.totalorder %s32, 0
      %p159 = por %p157, %p158
      %p160 = scmp.ne.s32.totalorder %s146, %s147
      %p161 = scmp.eq.s32.totalorder %s33, 1
      %p162 = por %p160, %p161
      %p164 = scmp.ne.s32.totalorder %s147, %s163
      %p165 = scmp.eq.s32.totalorder %s33, 0
      %p166 = por %p164, %p165
      %s167 = ssub.s32 %s35, %s42
      %p168 = scmp.eq.s32.totalorder %s167, 0
      %s170 = sadd.s32 %s169, 1
      %s171 = scalar_select %p168, %s169, %s170
      %p174 = pneg %p168
      %p175 = scmp.eq.s32.totalorder %s27, 1
      %p176 = por %p174, %p175
      %p177 = scmp.ne.s32.totalorder %s169, %s172
      %p178 = scmp.eq.s32.totalorder %s27, 0
      %p179 = por %p177, %p178
      %p180 = scmp.ne.s32.totalorder %s169, %s172
      %p181 = scmp.eq.s32.totalorder %s32, 1
      %p182 = por %p180, %p181
      %p183 = scmp.ne.s32.totalorder %s172, %s173
      %p184 = scmp.eq.s32.totalorder %s32, 0
      %p185 = por %p183, %p184
      %p186 = scmp.ne.s32.totalorder %s172, %s173
      %p187 = scmp.eq.s32.totalorder %s33, 1
      %p188 = por %p186, %p187
      %p190 = scmp.ne.s32.totalorder %s173, %s189
      %p191 = scmp.eq.s32.totalorder %s33, 0
      %p192 = por %p190, %p191
      %s193 = ssub.s32 %s35, %s42
      %p194 = scmp.eq.s32.totalorder %s193, 0
      %s196 = sadd.s32 %s195, 1
      %s197 = scalar_select %p194, %s195, %s196
      %p200 = pneg %p194
      %p201 = scmp.eq.s32.totalorder %s27, 1
      %p202 = por %p200, %p201
      %p203 = scmp.ne.s32.totalorder %s195, %s198
      %p204 = scmp.eq.s32.totalorder %s27, 0
      %p205 = por %p203, %p204
      %p206 = scmp.ne.s32.totalorder %s195, %s198
      %p207 = scmp.eq.s32.totalorder %s32, 1
      %p208 = por %p206, %p207
      %p209 = scmp.ne.s32.totalorder %s198, %s199
      %p210 = scmp.eq.s32.totalorder %s32, 0
      %p211 = por %p209, %p210
      %p212 = scmp.ne.s32.totalorder %s198, %s199
      %p213 = scmp.eq.s32.totalorder %s33, 1
      %p214 = por %p212, %p213
      %p216 = scmp.ne.s32.totalorder %s199, %s215
      %p217 = scmp.eq.s32.totalorder %s33, 0
      %p218 = por %p216, %p217
      %s220 = sadd.s32 %s219, 1
      %p223 = scmp.eq.s32.totalorder %s27, 1
      %p224 = scmp.ne.s32.totalorder %s219, %s221
      %p225 = scmp.eq.s32.totalorder %s27, 0
      %p226 = por %p224, %p225
      %p227 = scmp.ne.s32.totalorder %s219, %s221
      %p228 = scmp.eq.s32.totalorder %s32, 1
      %p229 = por %p227, %p228
      %p230 = scmp.ne.s32.totalorder %s221, %s222
      %p231 = scmp.eq.s32.totalorder %s32, 0
      %p232 = por %p230, %p231
      %p233 = scmp.ne.s32.totalorder %s221, %s222
      %p234 = scmp.eq.s32.totalorder %s33, 1
      %p235 = por %p233, %p234
      %p237 = scmp.ne.s32.totalorder %s222, %s236
      %p238 = scmp.eq.s32.totalorder %s33, 0
      %p239 = por %p237, %p238
      %s240 = ssub.s32 %s34, %s46
      %p241 = scmp.eq.s32.totalorder %s240, 0
      %s243 = sadd.s32 %s242, 1
      %s244 = scalar_select %p241, %s242, %s243
      %p247 = pneg %p241
      %p248 = scmp.eq.s32.totalorder %s27, 1
      %p249 = por %p247, %p248
      %p250 = scmp.ne.s32.totalorder %s242, %s245
      %p251 = scmp.eq.s32.totalorder %s27, 0
      %p252 = por %p250, %p251
      %p253 = scmp.ne.s32.totalorder %s242, %s245
      %p254 = scmp.eq.s32.totalorder %s32, 1
      %p255 = por %p253, %p254
      %p256 = scmp.ne.s32.totalorder %s245, %s246
      %p257 = scmp.eq.s32.totalorder %s32, 0
      %p258 = por %p256, %p257
      %p259 = scmp.ne.s32.totalorder %s245, %s246
      %p260 = scmp.eq.s32.totalorder %s33, 1
      %p261 = por %p259, %p260
      %p263 = scmp.ne.s32.totalorder %s246, %s262
      %p264 = scmp.eq.s32.totalorder %s33, 0
      %p265 = por %p263, %p264
      %s266 = ssub.s32 %s34, %s46
      %s267 = ssub.s32 %s35, %s42
      %s268 = sor.u32 %s266, %s267
      %p269 = scmp.eq.s32.totalorder %s268, 0
      %s271 = sadd.s32 %s270, 1
      %s272 = scalar_select %p269, %s270, %s271
      %p275 = pneg %p269
      %p276 = scmp.eq.s32.totalorder %s27, 1
      %p277 = por %p275, %p276
      %p278 = scmp.ne.s32.totalorder %s270, %s273
      %p279 = scmp.eq.s32.totalorder %s27, 0
      %p280 = por %p278, %p279
      %p281 = scmp.ne.s32.totalorder %s270, %s273
      %p282 = scmp.eq.s32.totalorder %s32, 1
      %p283 = por %p281, %p282
      %p284 = scmp.ne.s32.totalorder %s273, %s274
      %p285 = scmp.eq.s32.totalorder %s32, 0
      %p286 = por %p284, %p285
      %p287 = scmp.ne.s32.totalorder %s273, %s274
      %p288 = scmp.eq.s32.totalorder %s33, 1
      %p289 = por %p287, %p288
      %p291 = scmp.ne.s32.totalorder %s274, %s290
      %p292 = scmp.eq.s32.totalorder %s33, 0
      %p293 = por %p291, %p292
      %p294 = scmp.le.s32.totalorder 1, %s27
      %p295 = scmp.lt.s32.totalorder %s27, 3
      %p296 = pnand %p294, %p295
      %p297 = pneg %p296
      // Predicated region
      $region9: #{tpu_custom_call.1} parent=5 // pred_check
        _
      $region10: #{tpu_custom_call.1} parent=5 // pred_check_branch
        %299 = sbr.rel (%p296) target = $region12
      $region11: #{tpu_custom_call.1} parent=5 // pred_region
        %s300 = ssub.s32 %s27, 1
        // Predicated region
        $region13: #{tpu_custom_call.1} parent=11 // pred_check
          %p301 = pneg %p86
        $region14: #{tpu_custom_call.1} parent=11 // pred_check_branch
          %303 = sbr.rel (%p301) target = $region16
        $region15: #{tpu_custom_call.1} parent=11 // pred_region
          _
        $region16: #{tpu_custom_call.1} parent=11 // pred_fallthru
          _
        // Predicated region
        $region17: #{tpu_custom_call.1} parent=11 // pred_check
          %p304 = pneg %p107
        $region18: #{tpu_custom_call.1} parent=11 // pred_check_branch
          %306 = sbr.rel (%p304) target = $region20
        $region19: #{tpu_custom_call.1} parent=11 // pred_region
          _
        $region20: #{tpu_custom_call.1} parent=11 // pred_fallthru
          _
        // Predicated region
        $region21: #{tpu_custom_call.1} parent=11 // pred_check
          %p307 = pneg %p133
        $region22: #{tpu_custom_call.1} parent=11 // pred_check_branch
          %309 = sbr.rel (%p307) target = $region24
        $region23: #{tpu_custom_call.1} parent=11 // pred_region
          %s311 = ssub.s32 256, 256
          %312 = vsyncadd [#allocation7], %s311
          %s313 = smul.addr %s37, 4
          %s314 = smul.addr %s313, 64
          %s315 = scalar_lea.hbm %s3, %s314
          %s316 = sshll.u32 [#allocation6], 4
          %s317 = int_to_ptr.vmem [resolvable:$true] %s316
          %322 = dma.hbm_to_vmem [thread:$0]  %s315, 256, %s317, [#allocation7], 64, 64, 4
        $region24: #{tpu_custom_call.1} parent=11 // pred_fallthru
          _
        // Predicated region
        $region25: #{tpu_custom_call.1} parent=11 // pred_check
          %p323 = pneg %p159
        $region26: #{tpu_custom_call.1} parent=11 // pred_check_branch
          %325 = sbr.rel (%p323) target = $region28
        $region27: #{tpu_custom_call.1} parent=11 // pred_region
          %s327 = ssub.s32 256, 256
          %328 = vsyncadd [#allocation7], %s327
          %s329 = smul.addr %s37, 4
          %s330 = smul.addr %s329, 64
          %s331 = scalar_lea.hbm %s4, %s330
          %s332 = sshll.u32 [#allocation8], 4
          %s333 = int_to_ptr.vmem [resolvable:$true] %s332
          %338 = dma.hbm_to_vmem [thread:$0]  %s331, 256, %s333, [#allocation7], 64, 64, 4
        $region28: #{tpu_custom_call.1} parent=11 // pred_fallthru
          _
        // Predicated region
        $region29: #{tpu_custom_call.1} parent=11 // pred_check
          %p339 = pneg %p185
        $region30: #{tpu_custom_call.1} parent=11 // pred_check_branch
          %341 = sbr.rel (%p339) target = $region32
        $region31: #{tpu_custom_call.1} parent=11 // pred_region
          %p342 = scmp.lt.s32.totalorder %s37, 0
          %s343 = scalar_select %p342, %s37, 0
          %s344 = smul.addr %s343, 4
          %s345 = smul.addr %s344, 4
          %s346 = scalar_lea.vmem %s5, %s345
        $region32: #{tpu_custom_call.1} parent=11 // pred_fallthru
          _
        // Predicated region
        $region33: #{tpu_custom_call.1} parent=11 // pred_check
          %p347 = pneg %p211
        $region34: #{tpu_custom_call.1} parent=11 // pred_check_branch
          %349 = sbr.rel (%p347) target = $region36
        $region35: #{tpu_custom_call.1} parent=11 // pred_region
          %s351 = ssub.s32 256, 256
          %352 = vsyncadd [#allocation10], %s351
          %s353 = smul.addr %s37, 4
          %s354 = smul.addr %s353, 64
          %s355 = scalar_lea.hbm %s6, %s354
          %s356 = sshll.u32 [#allocation9], 4
          %s357 = int_to_ptr.vmem [resolvable:$true] %s356
          %362 = dma.hbm_to_vmem [thread:$0]  %s355, 256, %s357, [#allocation10], 64, 64, 4
        $region36: #{tpu_custom_call.1} parent=11 // pred_fallthru
          _
        // Predicated region
        $region37: #{tpu_custom_call.1} parent=11 // pred_check
          %p363 = pneg %p232
        $region38: #{tpu_custom_call.1} parent=11 // pred_check_branch
          %365 = sbr.rel (%p363) target = $region40
        $region39: #{tpu_custom_call.1} parent=11 // pred_region
          _
        $region40: #{tpu_custom_call.1} parent=11 // pred_fallthru
          _
      $region12: #{tpu_custom_call.1} parent=5 // pred_fallthru
        _
      %p366 = scmp.lt.s32.totalorder %s27, 2
      // Predicated region
      $region41: #{tpu_custom_call.1} parent=5 // pred_check
        %p367 = pneg %p366
      $region42: #{tpu_custom_call.1} parent=5 // pred_check_branch
        %369 = sbr.rel (%p367) target = $region44
      $region43: #{tpu_custom_call.1} parent=5 // pred_region
        // Predicated region
        $region45: #{tpu_custom_call.1} parent=43 // pred_check
          %p370 = pneg %p59
        $region46: #{tpu_custom_call.1} parent=43 // pred_check_branch
          %372 = sbr.rel (%p370) target = $region48
        $region47: #{tpu_custom_call.1} parent=43 // pred_region
          %s373 = sand.u32 %s49, 1
          %s374 = scalar_lea.sflag [#allocation4], %s373
          %s375 = sand.u32 %s49, 1
          %s376 = smul.addr %s375, 8
          %s377 = scalar_lea.vmem [#allocation3], %s376
          %s379 = ssub.s32 128, 128
          %380 = vsyncadd %s374, %s379
          %s381 = smul.addr %s34, 128
          %s382 = scalar_lea.hbm %s0, %s381
          %s384 = sshll.u32 %s377, 4
          %s385 = int_to_ptr.vmem [resolvable:$true] %s384
          %387 = dma.hbm_to_vmem [thread:$0]  %s382, 128, %s385, %s374
        $region48: #{tpu_custom_call.1} parent=43 // pred_fallthru
          _
      $region44: #{tpu_custom_call.1} parent=5 // pred_fallthru
        _
      %p388 = scmp.le.s32.totalorder 1, %s27
      %p389 = scmp.lt.s32.totalorder %s27, 3
      %p390 = pnand %p388, %p389
      %p391 = pneg %p390
      // Predicated region
      $region49: #{tpu_custom_call.1} parent=5 // pred_check
        _
      $region50: #{tpu_custom_call.1} parent=5 // pred_check_branch
        %393 = sbr.rel (%p390) target = $region52
      $region51: #{tpu_custom_call.1} parent=5 // pred_region
        %s394 = ssub.s32 %s27, 1
        %s395 = sand.u32 %s52, 1
        %s396 = scalar_lea.sflag [#allocation4], %s395
        %s397 = sand.u32 %s52, 1
        %s398 = smul.addr %s397, 8
        %s399 = scalar_lea.vmem [#allocation3], %s398
        // Predicated region
        $region53: #{tpu_custom_call.1} parent=51 // pred_check
          %p400 = pneg %p65
        $region54: #{tpu_custom_call.1} parent=51 // pred_check_branch
          %402 = sbr.rel (%p400) target = $region56
        $region55: #{tpu_custom_call.1} parent=51 // pred_region
          %403 = dma.done %s396, 128
        $region56: #{tpu_custom_call.1} parent=51 // pred_fallthru
          _
        // Predicated region
        $region57: #{tpu_custom_call.1} parent=51 // pred_check
          %p404 = pneg %p133
        $region58: #{tpu_custom_call.1} parent=51 // pred_check_branch
          %406 = sbr.rel (%p404) target = $region60
        $region59: #{tpu_custom_call.1} parent=51 // pred_region
          %407 = dma.done [#allocation7], 256
        $region60: #{tpu_custom_call.1} parent=51 // pred_fallthru
          _
        // Predicated region
        $region61: #{tpu_custom_call.1} parent=51 // pred_check
          %p408 = pneg %p159
        $region62: #{tpu_custom_call.1} parent=51 // pred_check_branch
          %410 = sbr.rel (%p408) target = $region64
        $region63: #{tpu_custom_call.1} parent=51 // pred_region
          %411 = dma.done [#allocation7], 256
        $region64: #{tpu_custom_call.1} parent=51 // pred_fallthru
          _
        // Predicated region
        $region65: #{tpu_custom_call.1} parent=51 // pred_check
          %p412 = pneg %p211
        $region66: #{tpu_custom_call.1} parent=51 // pred_check_branch
          %414 = sbr.rel (%p412) target = $region68
        $region67: #{tpu_custom_call.1} parent=51 // pred_region
          %415 = dma.done [#allocation10], 256
        $region68: #{tpu_custom_call.1} parent=51 // pred_fallthru
          _
        %s416 = sand.u32 %s52, 1
        %s417 = scalar_lea.sflag [#allocation4], %s416
        %s418 = sand.u32 %s52, 1
        %s419 = smul.addr %s418, 8
        %s420 = scalar_lea.vmem [#allocation3], %s419
        %p421 = pneg %p65
        %p422 = pneg %p62
        %p423 = pneg %p86
        %p424 = pneg %p83
        %p425 = pneg %p107
        %p426 = pneg %p104
        %p427 = pneg %p133
        %p428 = pneg %p130
        %p429 = pneg %p159
        %p430 = pneg %p156
        %p431 = scmp.lt.s32.totalorder %s37, 0
        %s432 = scalar_select %p431, %s37, 0
        %s433 = smul.addr %s432, 4
        %s434 = smul.addr %s433, 4
        %s435 = scalar_lea.vmem %s5, %s434
        %p436 = pneg %p185
        %p437 = pneg %p182
        %p438 = pneg %p211
        %p439 = pneg %p208
        %p440 = pneg %p232
        %p441 = pneg %p229
        %p442 = pneg %p258
        %p443 = pneg %p255
        %s444 = sand.u32 %s245, 1
        %s445 = scalar_lea.sflag [#allocation5], %s444
        %s446 = sand.u32 %s245, 1
        %s447 = smul.addr %s446, 8
        %s448 = scalar_lea.vmem [#allocation11], %s447
        %p449 = pneg %p286
        %p450 = pneg %p283
        %s451 = sand.u32 %s273, 1
        %s452 = scalar_lea.sflag [#allocation13], %s451
        %s453 = sand.u32 %s273, 1
        %s454 = smul.addr %s453, 16
        %s455 = scalar_lea.vmem [#allocation12], %s454
        %p456 = scmp.lt.s32.totalorder %s37, 0
        %s457 = scalar_select %p456, %s37, 0
        %s458 = smul.addr %s457, 4
        %s459 = smul.addr %s458, 4
        %s460 = scalar_lea.vmem %s5, %s459
        %s461 = smul.u32 4, %s37
        %p463 = scmp.eq.s32.totalorder %s37, 0
        // Predicated region
        $region69: #{tpu_custom_call.1} parent=51 // pred_check
          %p464 = pneg %p463
        $region70: #{tpu_custom_call.1} parent=51 // pred_check_branch
          %466 = sbr.rel (%p464) target = $region72
        $region71: #{tpu_custom_call.1} parent=51 // pred_region
          %v467 = vld [vmem:[%s399] sm:$0xff]
          %vm468 = vcmask 261120
          %v469 = vsel %vm468, %v467, 0.0
          %470 = vadd.xlane.f32.xlu0 %v469
          %v471 = vpop.xlane.xlu0 %470
          %v472 = vrcp.pop 32.0
          %v473 = vmul.f32 %v471, %v472
          %v474 = vsub.f32 %v467, %v473
          %v475 = vmul.f32 %v474, %v474
          %v476 = vsel %vm468, %v475, 0.0
          %477 = vadd.xlane.f32.xlu0 %v476
          %v478 = vpop.xlane.xlu0 %477
          %v479 = vmul.f32 %v478, %v472
          %v480 = vadd.f32 %v479, 1e-05
          %v481 = vrsqrt.pop %v480
          %v482 = vmul.f32 %v474, %v481
          %v483 = vld [vmem:[%s1] sm:$0x1]
          %v485 = vlaneseq
          %v486 = vshrl.u32 %v485, 7
          %v487 = vsub.s32 0, %v486
          %v488 = vrot.slane %v483, %v487
          %v490 = vmul.f32 %v482, %v488
          %v491 = vld [vmem:[%s2] sm:$0x1]
          %v493 = vlaneseq
          %v494 = vshrl.u32 %v493, 7
          %v495 = vsub.s32 0, %v494
          %v496 = vrot.slane %v491, %v495
          %v498 = vadd.f32 %v490, %v496
          %v499 = vpack.c.bf16 %v498, %v498
          %vm500 = vcmask 257024
          %501 = vst.msk [vmem:[#allocation2] sm:$0xf] %vm500, %v499
          %v502 = vld [vmem:[%s7] sm:$0x1]
          %v504 = vlaneseq
          %v505 = vshrl.u32 %v504, 7
          %v506 = vsub.s32 0, %v505
          %v507 = vrot.slane %v502, %v506
          %509 = vst.msk [vmem:[%s448] sm:$0xff] %vm468, %v507
        $region72: #{tpu_custom_call.1} parent=51 // pred_fallthru
          _
        %v510 = vld [vmem:[#allocation2] sm:$0xf]
        %v511 = vld [vmem:[#allocation6] sm:$0xf]
        %v512 = vld [vmem:[#allocation6 + $0x4] sm:$0xf]
        %v513 = vld [vmem:[#allocation6 + $0x8] sm:$0xf]
        %v514 = vld [vmem:[#allocation6 + $0xc] sm:$0xf]
        %v519 = vunpack.c.l.b16 %v511
        %v520 = vunpack.c.l.b16 %v512
        %v521 = vunpack.c.l.b16 %v513
        %v522 = vunpack.c.l.b16 %v514
        %v523 = vpack.c.b16 %v520, %v519
        %v524 = vpack.c.b16 %v522, %v521
        %vm527 = vcmask 261120
        %v529 = vsel %vm527, %v510, 0
        %531 = vmatprep.subr.bf16.mxu0 0
        %532 = vmatpush1.bf16.msra.mxu0 %v523
        %533 = vmatprep.subr.bf16.mxu0 0
        %534 = vmatpush1.bf16.msra.mxu0 %v524
        %535 = vmatprep.subr.bf16.mxu0 0
        %536 = vmatpush1.bf16.msra.mxu0 0
        %537 = vmatprep.subr.bf16.mxu0 0
        %538 = vmatpush1.bf16.msra.mxu0 0
        %539 = vmatprep.subr.bf16.mxu0 0
        %540 = vmatpush1.bf16.msra.mxu0 0
        %541 = vmatprep.subr.bf16.mxu0 0
        %542 = vmatpush1.bf16.msra.mxu0 0
        %543 = vmatprep.subr.bf16.mxu0 0
        %544 = vmatpush1.bf16.msra.mxu0 0
        %545 = vmatprep.subr.bf16.mxu0 0
        %546 = vmatpush1.bf16.msra.mxu0 0
        %547 = vmatprep.subr.bf16.mxu0 0
        %548 = vmatpush1.bf16.msra.mxu0 0
        %549 = vmatprep.subr.bf16.mxu0 0
        %550 = vmatpush1.bf16.msra.mxu0 0
        %551 = vmatprep.subr.bf16.mxu0 0
        %552 = vmatpush1.bf16.msra.mxu0 0
        %553 = vmatprep.subr.bf16.mxu0 0
        %554 = vmatpush1.bf16.msra.mxu0 0
        %555 = vmatprep.subr.bf16.mxu0 0
        %556 = vmatpush1.bf16.msra.mxu0 0
        %557 = vmatprep.subr.bf16.mxu0 0
        %558 = vmatpush1.bf16.msra.mxu0 0
        %559 = vmatprep.subr.bf16.mxu0 0
        %560 = vmatpush1.bf16.msra.mxu0 0
        %561 = vmatprep.subr.bf16.mxu0 0
        %562 = vmatpush1.bf16.msra.mxu0 0
        %563 = vmatprep.mubr.bf16.mxu0 0
        %564 = vmatmul.mubr.bf16.gmra.mrb[0].mxu0 %v529
        %v565 = vpop.f32.mrb[0].mxu0
        %v566 = vadd.f32 0.0, %v565
        %v567 = vpop.f32.mrb[0].mxu0
        %v568 = vpop.f32.mrb[0].mxu0
        %v569 = vpop.f32.mrb[0].mxu0
        %570 = vdwg.mxu0
        %v571 = vld [vmem:[#allocation8] sm:$0xf]
        %v572 = vld [vmem:[#allocation8 + $0x4] sm:$0xf]
        %v573 = vld [vmem:[#allocation8 + $0x8] sm:$0xf]
        %v574 = vld [vmem:[#allocation8 + $0xc] sm:$0xf]
        %v579 = vunpack.c.l.b16 %v571
        %v580 = vunpack.c.l.b16 %v572
        %v581 = vunpack.c.l.b16 %v573
        %v582 = vunpack.c.l.b16 %v574
        %v583 = vpack.c.b16 %v580, %v579
        %v584 = vpack.c.b16 %v582, %v581
        %587 = vmatprep.subr.bf16.mxu0 0
        %588 = vmatpush1.bf16.msra.mxu0 %v583
        %589 = vmatprep.subr.bf16.mxu0 0
        %590 = vmatpush1.bf16.msra.mxu0 %v584
        %591 = vmatprep.subr.bf16.mxu0 0
        %592 = vmatpush1.bf16.msra.mxu0 0
        %593 = vmatprep.subr.bf16.mxu0 0
        %594 = vmatpush1.bf16.msra.mxu0 0
        %595 = vmatprep.subr.bf16.mxu0 0
        %596 = vmatpush1.bf16.msra.mxu0 0
        %597 = vmatprep.subr.bf16.mxu0 0
        %598 = vmatpush1.bf16.msra.mxu0 0
        %599 = vmatprep.subr.bf16.mxu0 0
        %600 = vmatpush1.bf16.msra.mxu0 0
        %601 = vmatprep.subr.bf16.mxu0 0
        %602 = vmatpush1.bf16.msra.mxu0 0
        %603 = vmatprep.subr.bf16.mxu0 0
        %604 = vmatpush1.bf16.msra.mxu0 0
        %605 = vmatprep.subr.bf16.mxu0 0
        %606 = vmatpush1.bf16.msra.mxu0 0
        %607 = vmatprep.subr.bf16.mxu0 0
        %608 = vmatpush1.bf16.msra.mxu0 0
        %609 = vmatprep.subr.bf16.mxu0 0
        %610 = vmatpush1.bf16.msra.mxu0 0
        %611 = vmatprep.subr.bf16.mxu0 0
        %612 = vmatpush1.bf16.msra.mxu0 0
        %613 = vmatprep.subr.bf16.mxu0 0
        %614 = vmatpush1.bf16.msra.mxu0 0
        %615 = vmatprep.subr.bf16.mxu0 0
        %616 = vmatpush1.bf16.msra.mxu0 0
        %617 = vmatprep.subr.bf16.mxu0 0
        %618 = vmatpush1.bf16.msra.mxu0 0
        %619 = vmatprep.mubr.bf16.mxu0 0
        %620 = vmatmul.mubr.bf16.gmra.mrb[0].mxu0 %v529
        %v621 = vpop.f32.mrb[0].mxu0
        %v622 = vadd.f32 0.0, %v621
        %v623 = vpop.f32.mrb[0].mxu0
        %v624 = vpop.f32.mrb[0].mxu0
        %v625 = vpop.f32.mrb[0].mxu0
        %626 = vdwg.mxu0
        %v627 = vld [vmem:[%s460] sm:$0xf]
        %v628 = vld [vmem:[%s460 + $0x4] sm:$0xf]
        %v629 = vld [vmem:[%s460 + $0x8] sm:$0xf]
        %v630 = vld [vmem:[%s460 + $0xc] sm:$0xf]
        %v635 = vunpack.c.l.b16 %v627
        %v636 = vunpack.c.l.b16 %v628
        %v637 = vunpack.c.l.b16 %v629
        %v638 = vunpack.c.l.b16 %v630
        %v639 = vpack.c.b16 %v636, %v635
        %v640 = vpack.c.b16 %v638, %v637
        %643 = vmatprep.subr.bf16.mxu0 0
        %644 = vmatpush1.bf16.msra.mxu0 %v639
        %645 = vmatprep.subr.bf16.mxu0 0
        %646 = vmatpush1.bf16.msra.mxu0 %v640
        %647 = vmatprep.subr.bf16.mxu0 0
        %648 = vmatpush1.bf16.msra.mxu0 0
        %649 = vmatprep.subr.bf16.mxu0 0
        %650 = vmatpush1.bf16.msra.mxu0 0
        %651 = vmatprep.subr.bf16.mxu0 0
        %652 = vmatpush1.bf16.msra.mxu0 0
        %653 = vmatprep.subr.bf16.mxu0 0
        %654 = vmatpush1.bf16.msra.mxu0 0
        %655 = vmatprep.subr.bf16.mxu0 0
        %656 = vmatpush1.bf16.msra.mxu0 0
        %657 = vmatprep.subr.bf16.mxu0 0
        %658 = vmatpush1.bf16.msra.mxu0 0
        %659 = vmatprep.subr.bf16.mxu0 0
        %660 = vmatpush1.bf16.msra.mxu0 0
        %661 = vmatprep.subr.bf16.mxu0 0
        %662 = vmatpush1.bf16.msra.mxu0 0
        %663 = vmatprep.subr.bf16.mxu0 0
        %664 = vmatpush1.bf16.msra.mxu0 0
        %665 = vmatprep.subr.bf16.mxu0 0
        %666 = vmatpush1.bf16.msra.mxu0 0
        %667 = vmatprep.subr.bf16.mxu0 0
        %668 = vmatpush1.bf16.msra.mxu0 0
        %669 = vmatprep.subr.bf16.mxu0 0
        %670 = vmatpush1.bf16.msra.mxu0 0
        %671 = vmatprep.subr.bf16.mxu0 0
        %672 = vmatpush1.bf16.msra.mxu0 0
        %673 = vmatprep.subr.bf16.mxu0 0
        %674 = vmatpush1.bf16.msra.mxu0 0
        %675 = vmatprep.mubr.bf16.mxu0 0
        %676 = vmatmul.mubr.bf16.gmra.mrb[0].mxu0 %v529
        %v677 = vpop.f32.mrb[0].mxu0
        %v678 = vadd.f32 0.0, %v677
        %v679 = vpop.f32.mrb[0].mxu0
        %v680 = vpop.f32.mrb[0].mxu0
        %v681 = vpop.f32.mrb[0].mxu0
        %682 = vdwg.mxu0
        %v683 = vpack.c.bf16 %v566, %v566
        %v684 = vpack.c.bf16 %v622, %v622
        %v685 = vpack.c.bf16 %v678, %v678
        %vm686 = vcmask 64512
        %v688 = vsel %vm686, %v683, 0
        %v691 = vsel %vm686, %v684, 0
        %693 = vmatprep.subr.bf16.mxu0 0
        %694 = vmatpush1.bf16.xpose.msra.mxu0 %v691
        %695 = vmatprep.subr.bf16.mxu0 0
        %696 = vmatpush1.bf16.xpose.msra.mxu0 0
        %697 = vmatprep.subr.bf16.mxu0 0
        %698 = vmatpush1.bf16.xpose.msra.mxu0 0
        %699 = vmatprep.subr.bf16.mxu0 0
        %700 = vmatpush1.bf16.xpose.msra.mxu0 0
        %701 = vmatprep.subr.bf16.mxu0 0
        %702 = vmatpush1.bf16.xpose.msra.mxu0 0
        %703 = vmatprep.subr.bf16.mxu0 0
        %704 = vmatpush1.bf16.xpose.msra.mxu0 0
        %705 = vmatprep.subr.bf16.mxu0 0
        %706 = vmatpush1.bf16.xpose.msra.mxu0 0
        %707 = vmatprep.subr.bf16.mxu0 0
        %708 = vmatpush1.bf16.xpose.msra.mxu0 0
        %709 = vmatprep.subr.bf16.mxu0 0
        %710 = vmatpush1.bf16.xpose.msra.mxu0 0
        %711 = vmatprep.subr.bf16.mxu0 0
        %712 = vmatpush1.bf16.xpose.msra.mxu0 0
        %713 = vmatprep.subr.bf16.mxu0 0
        %714 = vmatpush1.bf16.xpose.msra.mxu0 0
        %715 = vmatprep.subr.bf16.mxu0 0
        %716 = vmatpush1.bf16.xpose.msra.mxu0 0
        %717 = vmatprep.subr.bf16.mxu0 0
        %718 = vmatpush1.bf16.xpose.msra.mxu0 0
        %719 = vmatprep.subr.bf16.mxu0 0
        %720 = vmatpush1.bf16.xpose.msra.mxu0 0
        %721 = vmatprep.subr.bf16.mxu0 0
        %722 = vmatpush1.bf16.xpose.msra.mxu0 0
        %723 = vmatprep.subr.bf16.mxu0 0
        %724 = vmatpush1.bf16.xpose.msra.mxu0 0
        %725 = vmatprep.mubr.bf16.mxu0 0
        %726 = vmatmul.mubr.bf16.gmra.mrb[0].mxu0 %v688
        %v727 = vpop.f32.mrb[0].mxu0
        %v728 = vadd.f32 0.0, %v727
        %v729 = vpop.f32.mrb[0].mxu0
        %v730 = vpop.f32.mrb[0].mxu0
        %v731 = vpop.f32.mrb[0].mxu0
        %732 = vdwg.mxu0
        %v733 = vsel %vm686, %v728, -inf
        %734 = vmax.xlane.f32.xlu0 %v733
        %v735 = vpop.xlane.xlu0 %734
        %v736 = vsub.f32 %v728, %v735
        %v737 = vmul.f32 %v736, 1.442695
        %v738 = vpow.pop %v737
        %v739 = vsel %vm686, %v738, 0.0
        %740 = vadd.xlane.f32.xlu0 %v739
        %v741 = vpop.xlane.xlu0 %740
        %v742 = vrcp.pop %v741
        %v743 = vmul.f32 %v738, %v742
        %v744 = vpack.c.bf16 %v743, %v743
        %vm745 = vcmask 60416
        %746 = vst.msk [vmem:[%s455] sm:$0xf] %vm745, %v744
        %v748 = vsel %vm686, %v744, 0
        %vm750 = vcmask 1043456
        %v752 = vsel %vm750, %v685, 0
        %754 = vmatprep.subr.bf16.mxu0 0
        %755 = vmatpush1.bf16.msra.mxu0 %v752
        %756 = vmatprep.subr.bf16.mxu0 0
        %757 = vmatpush1.bf16.msra.mxu0 0
        %758 = vmatprep.subr.bf16.mxu0 0
        %759 = vmatpush1.bf16.msra.mxu0 0
        %760 = vmatprep.subr.bf16.mxu0 0
        %761 = vmatpush1.bf16.msra.mxu0 0
        %762 = vmatprep.subr.bf16.mxu0 0
        %763 = vmatpush1.bf16.msra.mxu0 0
        %764 = vmatprep.subr.bf16.mxu0 0
        %765 = vmatpush1.bf16.msra.mxu0 0
        %766 = vmatprep.subr.bf16.mxu0 0
        %767 = vmatpush1.bf16.msra.mxu0 0
        %768 = vmatprep.subr.bf16.mxu0 0
        %769 = vmatpush1.bf16.msra.mxu0 0
        %770 = vmatprep.subr.bf16.mxu0 0
        %771 = vmatpush1.bf16.msra.mxu0 0
        %772 = vmatprep.subr.bf16.mxu0 0
        %773 = vmatpush1.bf16.msra.mxu0 0
        %774 = vmatprep.subr.bf16.mxu0 0
        %775 = vmatpush1.bf16.msra.mxu0 0
        %776 = vmatprep.subr.bf16.mxu0 0
        %777 = vmatpush1.bf16.msra.mxu0 0
        %778 = vmatprep.subr.bf16.mxu0 0
        %779 = vmatpush1.bf16.msra.mxu0 0
        %780 = vmatprep.subr.bf16.mxu0 0
        %781 = vmatpush1.bf16.msra.mxu0 0
        %782 = vmatprep.subr.bf16.mxu0 0
        %783 = vmatpush1.bf16.msra.mxu0 0
        %784 = vmatprep.subr.bf16.mxu0 0
        %785 = vmatpush1.bf16.msra.mxu0 0
        %786 = vmatprep.mubr.bf16.mxu0 0
        %787 = vmatmul.mubr.bf16.gmra.mrb[0].mxu0 %v748
        %v788 = vpop.f32.mrb[0].mxu0
        %v789 = vadd.f32 0.0, %v788
        %v790 = vpop.f32.mrb[0].mxu0
        %v791 = vpop.f32.mrb[0].mxu0
        %v792 = vpop.f32.mrb[0].mxu0
        %793 = vdwg.mxu0
        %v794 = vpack.c.bf16 %v789, %v789
        %796 = vrot.lane.b32.xlu0 %v683, 120
        %v797 = vpop.permute.xlu0 %796
        %799 = vrot.lane.b32.xlu0 %v684, 120
        %v800 = vpop.permute.xlu0 %799
        %v802 = vsel %vm686, %v797, 0
        %v805 = vsel %vm686, %v800, 0
        %807 = vmatprep.subr.bf16.mxu0 0
        %808 = vmatpush1.bf16.xpose.msra.mxu0 %v805
        %809 = vmatprep.subr.bf16.mxu0 0
        %810 = vmatpush1.bf16.xpose.msra.mxu0 0
        %811 = vmatprep.subr.bf16.mxu0 0
        %812 = vmatpush1.bf16.xpose.msra.mxu0 0
        %813 = vmatprep.subr.bf16.mxu0 0
        %814 = vmatpush1.bf16.xpose.msra.mxu0 0
        %815 = vmatprep.subr.bf16.mxu0 0
        %816 = vmatpush1.bf16.xpose.msra.mxu0 0
        %817 = vmatprep.subr.bf16.mxu0 0
        %818 = vmatpush1.bf16.xpose.msra.mxu0 0
        %819 = vmatprep.subr.bf16.mxu0 0
        %820 = vmatpush1.bf16.xpose.msra.mxu0 0
        %821 = vmatprep.subr.bf16.mxu0 0
        %822 = vmatpush1.bf16.xpose.msra.mxu0 0
        %823 = vmatprep.subr.bf16.mxu0 0
        %824 = vmatpush1.bf16.xpose.msra.mxu0 0
        %825 = vmatprep.subr.bf16.mxu0 0
        %826 = vmatpush1.bf16.xpose.msra.mxu0 0
        %827 = vmatprep.subr.bf16.mxu0 0
        %828 = vmatpush1.bf16.xpose.msra.mxu0 0
        %829 = vmatprep.subr.bf16.mxu0 0
        %830 = vmatpush1.bf16.xpose.msra.mxu0 0
        %831 = vmatprep.subr.bf16.mxu0 0
        %832 = vmatpush1.bf16.xpose.msra.mxu0 0
        %833 = vmatprep.subr.bf16.mxu0 0
        %834 = vmatpush1.bf16.xpose.msra.mxu0 0
        %835 = vmatprep.subr.bf16.mxu0 0
        %836 = vmatpush1.bf16.xpose.msra.mxu0 0
        %837 = vmatprep.subr.bf16.mxu0 0
        %838 = vmatpush1.bf16.xpose.msra.mxu0 0
        %839 = vmatprep.mubr.bf16.mxu0 0
        %840 = vmatmul.mubr.bf16.gmra.mrb[0].mxu0 %v802
        %v841 = vpop.f32.mrb[0].mxu0
        %v842 = vadd.f32 0.0, %v841
        %v843 = vpop.f32.mrb[0].mxu0
        %v844 = vpop.f32.mrb[0].mxu0
        %v845 = vpop.f32.mrb[0].mxu0
        %846 = vdwg.mxu0
        %v847 = vsel %vm686, %v842, -inf
        %848 = vmax.xlane.f32.xlu0 %v847
        %v849 = vpop.xlane.xlu0 %848
        %v850 = vsub.f32 %v842, %v849
        %v851 = vmul.f32 %v850, 1.442695
        %v852 = vpow.pop %v851
        %v853 = vsel %vm686, %v852, 0.0
        %854 = vadd.xlane.f32.xlu0 %v853
        %v855 = vpop.xlane.xlu0 %854
        %v856 = vrcp.pop %v855
        %v857 = vmul.f32 %v852, %v856
        %v858 = vpack.c.bf16 %v857, %v857
        %s859 = scalar_lea.vmem %s455, 4 [#allocation12]
        %860 = vst.msk [vmem:[%s859] sm:$0xf] %vm745, %v858
        %862 = vrot.lane.b32.xlu0 %v685, 120
        %v863 = vpop.permute.xlu0 %862
        %v865 = vsel %vm686, %v858, 0
        %v868 = vsel %vm750, %v863, 0
        %870 = vmatprep.subr.bf16.mxu0 0
        %871 = vmatpush1.bf16.msra.mxu0 %v868
        %872 = vmatprep.subr.bf16.mxu0 0
        %873 = vmatpush1.bf16.msra.mxu0 0
        %874 = vmatprep.subr.bf16.mxu0 0
        %875 = vmatpush1.bf16.msra.mxu0 0
        %876 = vmatprep.subr.bf16.mxu0 0
        %877 = vmatpush1.bf16.msra.mxu0 0
        %878 = vmatprep.subr.bf16.mxu0 0
        %879 = vmatpush1.bf16.msra.mxu0 0
        %880 = vmatprep.subr.bf16.mxu0 0
        %881 = vmatpush1.bf16.msra.mxu0 0
        %882 = vmatprep.subr.bf16.mxu0 0
        %883 = vmatpush1.bf16.msra.mxu0 0
        %884 = vmatprep.subr.bf16.mxu0 0
        %885 = vmatpush1.bf16.msra.mxu0 0
        %886 = vmatprep.subr.bf16.mxu0 0
        %887 = vmatpush1.bf16.msra.mxu0 0
        %888 = vmatprep.subr.bf16.mxu0 0
        %889 = vmatpush1.bf16.msra.mxu0 0
        %890 = vmatprep.subr.bf16.mxu0 0
        %891 = vmatpush1.bf16.msra.mxu0 0
        %892 = vmatprep.subr.bf16.mxu0 0
        %893 = vmatpush1.bf16.msra.mxu0 0
        %894 = vmatprep.subr.bf16.mxu0 0
        %895 = vmatpush1.bf16.msra.mxu0 0
        %896 = vmatprep.subr.bf16.mxu0 0
        %897 = vmatpush1.bf16.msra.mxu0 0
        %898 = vmatprep.subr.bf16.mxu0 0
        %899 = vmatpush1.bf16.msra.mxu0 0
        %900 = vmatprep.subr.bf16.mxu0 0
        %901 = vmatpush1.bf16.msra.mxu0 0
        %902 = vmatprep.mubr.bf16.mxu0 0
        %903 = vmatmul.mubr.bf16.gmra.mrb[0].mxu0 %v865
        %v904 = vpop.f32.mrb[0].mxu0
        %v905 = vadd.f32 0.0, %v904
        %v906 = vpop.f32.mrb[0].mxu0
        %v907 = vpop.f32.mrb[0].mxu0
        %v908 = vpop.f32.mrb[0].mxu0
        %909 = vdwg.mxu0
        %v910 = vpack.c.bf16 %v905, %v905
        %911 = vrot.lane.b32.xlu0 %v683, 112
        %v912 = vpop.permute.xlu0 %911
        %913 = vrot.lane.b32.xlu0 %v684, 112
        %v914 = vpop.permute.xlu0 %913
        %v916 = vsel %vm686, %v912, 0
        %v919 = vsel %vm686, %v914, 0
        %921 = vmatprep.subr.bf16.mxu0 0
        %922 = vmatpush1.bf16.xpose.msra.mxu0 %v919
        %923 = vmatprep.subr.bf16.mxu0 0
        %924 = vmatpush1.bf16.xpose.msra.mxu0 0
        %925 = vmatprep.subr.bf16.mxu0 0
        %926 = vmatpush1.bf16.xpose.msra.mxu0 0
        %927 = vmatprep.subr.bf16.mxu0 0
        %928 = vmatpush1.bf16.xpose.msra.mxu0 0
        %929 = vmatprep.subr.bf16.mxu0 0
        %930 = vmatpush1.bf16.xpose.msra.mxu0 0
        %931 = vmatprep.subr.bf16.mxu0 0
        %932 = vmatpush1.bf16.xpose.msra.mxu0 0
        %933 = vmatprep.subr.bf16.mxu0 0
        %934 = vmatpush1.bf16.xpose.msra.mxu0 0
        %935 = vmatprep.subr.bf16.mxu0 0
        %936 = vmatpush1.bf16.xpose.msra.mxu0 0
        %937 = vmatprep.subr.bf16.mxu0 0
        %938 = vmatpush1.bf16.xpose.msra.mxu0 0
        %939 = vmatprep.subr.bf16.mxu0 0
        %940 = vmatpush1.bf16.xpose.msra.mxu0 0
        %941 = vmatprep.subr.bf16.mxu0 0
        %942 = vmatpush1.bf16.xpose.msra.mxu0 0
        %943 = vmatprep.subr.bf16.mxu0 0
        %944 = vmatpush1.bf16.xpose.msra.mxu0 0
        %945 = vmatprep.subr.bf16.mxu0 0
        %946 = vmatpush1.bf16.xpose.msra.mxu0 0
        %947 = vmatprep.subr.bf16.mxu0 0
        %948 = vmatpush1.bf16.xpose.msra.mxu0 0
        %949 = vmatprep.subr.bf16.mxu0 0
        %950 = vmatpush1.bf16.xpose.msra.mxu0 0
        %951 = vmatprep.subr.bf16.mxu0 0
        %952 = vmatpush1.bf16.xpose.msra.mxu0 0
        %953 = vmatprep.mubr.bf16.mxu0 0
        %954 = vmatmul.mubr.bf16.gmra.mrb[0].mxu0 %v916
        %v955 = vpop.f32.mrb[0].mxu0
        %v956 = vadd.f32 0.0, %v955
        %v957 = vpop.f32.mrb[0].mxu0
        %v958 = vpop.f32.mrb[0].mxu0
        %v959 = vpop.f32.mrb[0].mxu0
        %960 = vdwg.mxu0
        %v961 = vsel %vm686, %v956, -inf
        %962 = vmax.xlane.f32.xlu0 %v961
        %v963 = vpop.xlane.xlu0 %962
        %v964 = vsub.f32 %v956, %v963
        %v965 = vmul.f32 %v964, 1.442695
        %v966 = vpow.pop %v965
        %v967 = vsel %vm686, %v966, 0.0
        %968 = vadd.xlane.f32.xlu0 %v967
        %v969 = vpop.xlane.xlu0 %968
        %v970 = vrcp.pop %v969
        %v971 = vmul.f32 %v966, %v970
        %v972 = vpack.c.bf16 %v971, %v971
        %s973 = scalar_lea.vmem %s455, 8 [#allocation12]
        %974 = vst.msk [vmem:[%s973] sm:$0xf] %vm745, %v972
        %975 = vrot.lane.b32.xlu0 %v685, 112
        %v976 = vpop.permute.xlu0 %975
        %v978 = vsel %vm686, %v972, 0
        %v981 = vsel %vm750, %v976, 0
        %983 = vmatprep.subr.bf16.mxu0 0
        %984 = vmatpush1.bf16.msra.mxu0 %v981
        %985 = vmatprep.subr.bf16.mxu0 0
        %986 = vmatpush1.bf16.msra.mxu0 0
        %987 = vmatprep.subr.bf16.mxu0 0
        %988 = vmatpush1.bf16.msra.mxu0 0
        %989 = vmatprep.subr.bf16.mxu0 0
        %990 = vmatpush1.bf16.msra.mxu0 0
        %991 = vmatprep.subr.bf16.mxu0 0
        %992 = vmatpush1.bf16.msra.mxu0 0
        %993 = vmatprep.subr.bf16.mxu0 0
        %994 = vmatpush1.bf16.msra.mxu0 0
        %995 = vmatprep.subr.bf16.mxu0 0
        %996 = vmatpush1.bf16.msra.mxu0 0
        %997 = vmatprep.subr.bf16.mxu0 0
        %998 = vmatpush1.bf16.msra.mxu0 0
        %999 = vmatprep.subr.bf16.mxu0 0
        %1000 = vmatpush1.bf16.msra.mxu0 0
        %1001 = vmatprep.subr.bf16.mxu0 0
        %1002 = vmatpush1.bf16.msra.mxu0 0
        %1003 = vmatprep.subr.bf16.mxu0 0
        %1004 = vmatpush1.bf16.msra.mxu0 0
        %1005 = vmatprep.subr.bf16.mxu0 0
        %1006 = vmatpush1.bf16.msra.mxu0 0
        %1007 = vmatprep.subr.bf16.mxu0 0
        %1008 = vmatpush1.bf16.msra.mxu0 0
        %1009 = vmatprep.subr.bf16.mxu0 0
        %1010 = vmatpush1.bf16.msra.mxu0 0
        %1011 = vmatprep.subr.bf16.mxu0 0
        %1012 = vmatpush1.bf16.msra.mxu0 0
        %1013 = vmatprep.subr.bf16.mxu0 0
        %1014 = vmatpush1.bf16.msra.mxu0 0
        %1015 = vmatprep.mubr.bf16.mxu0 0
        %1016 = vmatmul.mubr.bf16.gmra.mrb[0].mxu0 %v978
        %v1017 = vpop.f32.mrb[0].mxu0
        %v1018 = vadd.f32 0.0, %v1017
        %v1019 = vpop.f32.mrb[0].mxu0
        %v1020 = vpop.f32.mrb[0].mxu0
        %v1021 = vpop.f32.mrb[0].mxu0
        %1022 = vdwg.mxu0
        %v1023 = vpack.c.bf16 %v1018, %v1018
        %1024 = vrot.lane.b32.xlu0 %v683, 104
        %v1025 = vpop.permute.xlu0 %1024
        %1026 = vrot.lane.b32.xlu0 %v684, 104
        %v1027 = vpop.permute.xlu0 %1026
        %v1029 = vsel %vm686, %v1025, 0
        %v1032 = vsel %vm686, %v1027, 0
        %1034 = vmatprep.subr.bf16.mxu0 0
        %1035 = vmatpush1.bf16.xpose.msra.mxu0 %v1032
        %1036 = vmatprep.subr.bf16.mxu0 0
        %1037 = vmatpush1.bf16.xpose.msra.mxu0 0
        %1038 = vmatprep.subr.bf16.mxu0 0
        %1039 = vmatpush1.bf16.xpose.msra.mxu0 0
        %1040 = vmatprep.subr.bf16.mxu0 0
        %1041 = vmatpush1.bf16.xpose.msra.mxu0 0
        %1042 = vmatprep.subr.bf16.mxu0 0
        %1043 = vmatpush1.bf16.xpose.msra.mxu0 0
        %1044 = vmatprep.subr.bf16.mxu0 0
        %1045 = vmatpush1.bf16.xpose.msra.mxu0 0
        %1046 = vmatprep.subr.bf16.mxu0 0
        %1047 = vmatpush1.bf16.xpose.msra.mxu0 0
        %1048 = vmatprep.subr.bf16.mxu0 0
        %1049 = vmatpush1.bf16.xpose.msra.mxu0 0
        %1050 = vmatprep.subr.bf16.mxu0 0
        %1051 = vmatpush1.bf16.xpose.msra.mxu0 0
        %1052 = vmatprep.subr.bf16.mxu0 0
        %1053 = vmatpush1.bf16.xpose.msra.mxu0 0
        %1054 = vmatprep.subr.bf16.mxu0 0
        %1055 = vmatpush1.bf16.xpose.msra.mxu0 0
        %1056 = vmatprep.subr.bf16.mxu0 0
        %1057 = vmatpush1.bf16.xpose.msra.mxu0 0
        %1058 = vmatprep.subr.bf16.mxu0 0
        %1059 = vmatpush1.bf16.xpose.msra.mxu0 0
        %1060 = vmatprep.subr.bf16.mxu0 0
        %1061 = vmatpush1.bf16.xpose.msra.mxu0 0
        %1062 = vmatprep.subr.bf16.mxu0 0
        %1063 = vmatpush1.bf16.xpose.msra.mxu0 0
        %1064 = vmatprep.subr.bf16.mxu0 0
        %1065 = vmatpush1.bf16.xpose.msra.mxu0 0
        %1066 = vmatprep.mubr.bf16.mxu0 0
        %1067 = vmatmul.mubr.bf16.gmra.mrb[0].mxu0 %v1029
        %v1068 = vpop.f32.mrb[0].mxu0
        %v1069 = vadd.f32 0.0, %v1068
        %v1070 = vpop.f32.mrb[0].mxu0
        %v1071 = vpop.f32.mrb[0].mxu0
        %v1072 = vpop.f32.mrb[0].mxu0
        %1073 = vdwg.mxu0
        %v1074 = vsel %vm686, %v1069, -inf
        %1075 = vmax.xlane.f32.xlu0 %v1074
        %v1076 = vpop.xlane.xlu0 %1075
        %v1077 = vsub.f32 %v1069, %v1076
        %v1078 = vmul.f32 %v1077, 1.442695
        %v1079 = vpow.pop %v1078
        %v1080 = vsel %vm686, %v1079, 0.0
        %1081 = vadd.xlane.f32.xlu0 %v1080
        %v1082 = vpop.xlane.xlu0 %1081
        %v1083 = vrcp.pop %v1082
        %v1084 = vmul.f32 %v1079, %v1083
        %v1085 = vpack.c.bf16 %v1084, %v1084
        %s1086 = scalar_lea.vmem %s455, 12 [#allocation12]
        %1087 = vst.msk [vmem:[%s1086] sm:$0xf] %vm745, %v1085
        %1088 = vrot.lane.b32.xlu0 %v685, 104
        %v1089 = vpop.permute.xlu0 %1088
        %v1091 = vsel %vm686, %v1085, 0
        %v1094 = vsel %vm750, %v1089, 0
        %1096 = vmatprep.subr.bf16.mxu0 0
        %1097 = vmatpush1.bf16.msra.mxu0 %v1094
        %1098 = vmatprep.subr.bf16.mxu0 0
        %1099 = vmatpush1.bf16.msra.mxu0 0
        %1100 = vmatprep.subr.bf16.mxu0 0
        %1101 = vmatpush1.bf16.msra.mxu0 0
        %1102 = vmatprep.subr.bf16.mxu0 0
        %1103 = vmatpush1.bf16.msra.mxu0 0
        %1104 = vmatprep.subr.bf16.mxu0 0
        %1105 = vmatpush1.bf16.msra.mxu0 0
        %1106 = vmatprep.subr.bf16.mxu0 0
        %1107 = vmatpush1.bf16.msra.mxu0 0
        %1108 = vmatprep.subr.bf16.mxu0 0
        %1109 = vmatpush1.bf16.msra.mxu0 0
        %1110 = vmatprep.subr.bf16.mxu0 0
        %1111 = vmatpush1.bf16.msra.mxu0 0
        %1112 = vmatprep.subr.bf16.mxu0 0
        %1113 = vmatpush1.bf16.msra.mxu0 0
        %1114 = vmatprep.subr.bf16.mxu0 0
        %1115 = vmatpush1.bf16.msra.mxu0 0
        %1116 = vmatprep.subr.bf16.mxu0 0
        %1117 = vmatpush1.bf16.msra.mxu0 0
        %1118 = vmatprep.subr.bf16.mxu0 0
        %1119 = vmatpush1.bf16.msra.mxu0 0
        %1120 = vmatprep.subr.bf16.mxu0 0
        %1121 = vmatpush1.bf16.msra.mxu0 0
        %1122 = vmatprep.subr.bf16.mxu0 0
        %1123 = vmatpush1.bf16.msra.mxu0 0
        %1124 = vmatprep.subr.bf16.mxu0 0
        %1125 = vmatpush1.bf16.msra.mxu0 0
        %1126 = vmatprep.subr.bf16.mxu0 0
        %1127 = vmatpush1.bf16.msra.mxu0 0
        %1128 = vmatprep.mubr.bf16.mxu0 0
        %1129 = vmatmul.mubr.bf16.gmra.mrb[0].mxu0 %v1091
        %v1130 = vpop.f32.mrb[0].mxu0
        %v1131 = vadd.f32 0.0, %v1130
        %v1132 = vpop.f32.mrb[0].mxu0
        %v1133 = vpop.f32.mrb[0].mxu0
        %v1134 = vpop.f32.mrb[0].mxu0
        %1135 = vdwg.mxu0
        %v1136 = vpack.c.bf16 %v1131, %v1131
        %1138 = vrot.lane.b32.xlu0 %v910, 8
        %v1139 = vpop.permute.xlu0 %1138
        %1141 = vrot.lane.b32.xlu0 %v1023, 16
        %v1142 = vpop.permute.xlu0 %1141
        %1144 = vrot.lane.b32.xlu0 %v1136, 24
        %v1145 = vpop.permute.xlu0 %1144
        %v1148 = vsel %vm686, %v794, %v1139
        %vm1149 = vcmask 130048
        %v1151 = vsel %vm1149, %v1148, %v1142
        %vm1152 = vcmask 195584
        %v1154 = vsel %vm1152, %v1151, %v1145
        %v1155 = vld [vmem:[%s448] sm:$0xff]
        %v1156 = vld [vmem:[#allocation9] sm:$0xf]
        %v1157 = vld [vmem:[#allocation9 + $0x4] sm:$0xf]
        %v1158 = vld [vmem:[#allocation9 + $0x8] sm:$0xf]
        %v1159 = vld [vmem:[#allocation9 + $0xc] sm:$0xf]
        %v1164 = vunpack.c.l.b16 %v1156
        %v1165 = vunpack.c.l.b16 %v1157
        %v1166 = vunpack.c.l.b16 %v1158
        %v1167 = vunpack.c.l.b16 %v1159
        %v1168 = vpack.c.b16 %v1165, %v1164
        %v1169 = vpack.c.b16 %v1167, %v1166
        %v1172 = vsel %vm527, %v1154, 0
        %1174 = vmatprep.subr.bf16.mxu0 0
        %1175 = vmatpush1.bf16.msra.mxu0 %v1168
        %1176 = vmatprep.subr.bf16.mxu0 0
        %1177 = vmatpush1.bf16.msra.mxu0 %v1169
        %1178 = vmatprep.subr.bf16.mxu0 0
        %1179 = vmatpush1.bf16.msra.mxu0 0
        %1180 = vmatprep.subr.bf16.mxu0 0
        %1181 = vmatpush1.bf16.msra.mxu0 0
        %1182 = vmatprep.subr.bf16.mxu0 0
        %1183 = vmatpush1.bf16.msra.mxu0 0
        %1184 = vmatprep.subr.bf16.mxu0 0
        %1185 = vmatpush1.bf16.msra.mxu0 0
        %1186 = vmatprep.subr.bf16.mxu0 0
        %1187 = vmatpush1.bf16.msra.mxu0 0
        %1188 = vmatprep.subr.bf16.mxu0 0
        %1189 = vmatpush1.bf16.msra.mxu0 0
        %1190 = vmatprep.subr.bf16.mxu0 0
        %1191 = vmatpush1.bf16.msra.mxu0 0
        %1192 = vmatprep.subr.bf16.mxu0 0
        %1193 = vmatpush1.bf16.msra.mxu0 0
        %1194 = vmatprep.subr.bf16.mxu0 0
        %1195 = vmatpush1.bf16.msra.mxu0 0
        %1196 = vmatprep.subr.bf16.mxu0 0
        %1197 = vmatpush1.bf16.msra.mxu0 0
        %1198 = vmatprep.subr.bf16.mxu0 0
        %1199 = vmatpush1.bf16.msra.mxu0 0
        %1200 = vmatprep.subr.bf16.mxu0 0
        %1201 = vmatpush1.bf16.msra.mxu0 0
        %1202 = vmatprep.subr.bf16.mxu0 0
        %1203 = vmatpush1.bf16.msra.mxu0 0
        %1204 = vmatprep.subr.bf16.mxu0 0
        %1205 = vmatpush1.bf16.msra.mxu0 0
        %1206 = vmatprep.mubr.bf16.mxu0 0
        %1207 = vmatmul.mubr.bf16.gmra.mrb[0].mxu0 %v1172
        %v1208 = vpop.f32.mrb[0].mxu0
        %v1209 = vadd.f32 0.0, %v1208
        %v1210 = vpop.f32.mrb[0].mxu0
        %v1211 = vpop.f32.mrb[0].mxu0
        %v1212 = vpop.f32.mrb[0].mxu0
        %1213 = vdwg.mxu0
        %v1214 = vadd.f32 %v1155, %v1209
        %1215 = vst.msk [vmem:[%s448] sm:$0xff] %vm527, %v1214
        %s1216 = sand.u32 %s245, 1
        %s1217 = scalar_lea.sflag [#allocation5], %s1216
        %s1218 = sand.u32 %s245, 1
        %s1219 = smul.addr %s1218, 8
        %s1220 = scalar_lea.vmem [#allocation11], %s1219
        %s1221 = sand.u32 %s273, 1
        %s1222 = scalar_lea.sflag [#allocation13], %s1221
        %s1223 = sand.u32 %s273, 1
        %s1224 = smul.addr %s1223, 16
        %s1225 = scalar_lea.vmem [#allocation12], %s1224
        // Predicated region
        $region73: #{tpu_custom_call.1} parent=51 // pred_check
          %p1226 = pneg %p255
        $region74: #{tpu_custom_call.1} parent=51 // pred_check_branch
          %1228 = sbr.rel (%p1226) target = $region76
        $region75: #{tpu_custom_call.1} parent=51 // pred_region
          %s1230 = ssub.s32 128, 128
          %1231 = vsyncadd %s1217, %s1230
          %s1232 = smul.addr %s36, 128
          %s1233 = scalar_lea.hbm %s8, %s1232
          %s1235 = sshll.u32 %s1220, 4
          %s1236 = int_to_ptr.vmem [resolvable:$true] %s1235
          %1238 = dma.vmem_to_hbm [thread:$0]  %s1236, 128, %s1233, %s1217
        $region76: #{tpu_custom_call.1} parent=51 // pred_fallthru
          _
        // Predicated region
        $region77: #{tpu_custom_call.1} parent=51 // pred_check
          %p1239 = pneg %p283
        $region78: #{tpu_custom_call.1} parent=51 // pred_check_branch
          %1241 = sbr.rel (%p1239) target = $region80
        $region79: #{tpu_custom_call.1} parent=51 // pred_region
          %s1242 = smul.u32 4, %s37
          %s1244 = ssub.s32 256, 256
          %1245 = vsyncadd %s1222, %s1244
          %s1246 = smul.addr %s36, 4
          %s1247 = sadd.s32 %s1242, %s1246
          %s1248 = smul.addr %s1247, 64
          %s1249 = scalar_lea.hbm %s9, %s1248
          %s1250 = sshll.u32 %s1225, 4
          %s1251 = int_to_ptr.vmem [resolvable:$true] %s1250
          %1256 = dma.vmem_to_hbm [thread:$0]  %s1251, 256, %s1249, %s1222, 64, 64, 4
        $region80: #{tpu_custom_call.1} parent=51 // pred_fallthru
          _
      $region52: #{tpu_custom_call.1} parent=5 // pred_fallthru
        _
      %p1257 = scmp.le.s32.totalorder 2, %s27
      // Predicated region
      $region81: #{tpu_custom_call.1} parent=5 // pred_check
        %p1258 = pneg %p1257
      $region82: #{tpu_custom_call.1} parent=5 // pred_check_branch
        %1260 = sbr.rel (%p1258) target = $region84
      $region83: #{tpu_custom_call.1} parent=5 // pred_region
        %s1261 = ssub.s32 %s27, 2
        // Predicated region
        $region85: #{tpu_custom_call.1} parent=83 // pred_check
          %p1262 = pneg %p261
        $region86: #{tpu_custom_call.1} parent=83 // pred_check_branch
          %1264 = sbr.rel (%p1262) target = $region88
        $region87: #{tpu_custom_call.1} parent=83 // pred_region
          %s1265 = sand.u32 %s246, 1
          %s1266 = scalar_lea.sflag [#allocation5], %s1265
          %s1267 = sand.u32 %s246, 1
          %s1268 = smul.addr %s1267, 8
          %s1269 = scalar_lea.vmem [#allocation11], %s1268
          %1270 = dma.done %s1266, 128
        $region88: #{tpu_custom_call.1} parent=83 // pred_fallthru
          _
        // Predicated region
        $region89: #{tpu_custom_call.1} parent=83 // pred_check
          %p1271 = pneg %p289
        $region90: #{tpu_custom_call.1} parent=83 // pred_check_branch
          %1273 = sbr.rel (%p1271) target = $region92
        $region91: #{tpu_custom_call.1} parent=83 // pred_region
          %s1274 = sand.u32 %s274, 1
          %s1275 = scalar_lea.sflag [#allocation13], %s1274
          %s1276 = sand.u32 %s274, 1
          %s1277 = smul.addr %s1276, 16
          %s1278 = scalar_lea.vmem [#allocation12], %s1277
          %1279 = dma.done %s1275, 256
        $region92: #{tpu_custom_call.1} parent=83 // pred_fallthru
          _
      $region84: #{tpu_custom_call.1} parent=5 // pred_fallthru
        _
    $region6: #{tpu_custom_call.1} parent=1 // loop_footer
      %s31 = sadd.s32 1, %s27
    $region7: #{tpu_custom_call.1} parent=1 // loop_footer_branch
      %26 = sbr.rel target = $region3
    $region8: #{tpu_custom_call.1} parent=1 // loop_exit
      _
    %1280 = vsyncpa [#allocation4], 1
    %s1281 = scalar_lea.sflag [#allocation4], 1
    %1282 = vsyncpa %s1281, 1
    %1283 = vsyncpa [#allocation7], 1
    %1284 = vsyncpa [#allocation10], 1
    %1285 = vsyncpa [#allocation5], 1
    %s1286 = scalar_lea.sflag [#allocation5], 1
    %1287 = vsyncpa %s1286, 1
    %1288 = vsyncpa [#allocation13], 1
    %s1289 = scalar_lea.sflag [#allocation13], 1
    %1290 = vsyncpa %s1289, 1

</llo_original>
